<compile_context>
chip_gen: v6e
topology: v6e:2x2x1
jax: 0.10.0
libtpu: 0.0.40
codegen_flags: <defaults>
</compile_context>

<pallas_src>
import jax
import jax.numpy as jnp
from jax import lax
from jax.experimental import pallas as pl
from jax.experimental.pallas import tpu as pltpu
import numpy as np


# ---------------------------------------------------------------------------
# Kernel
# ---------------------------------------------------------------------------
def bilstm_kernel(emb_ref, len_ref, wx_ref, wh_ref, b_ref, h_ref, gx_ref):
    """Fused bidirectional LSTM recurrence.

    emb_ref : (T, B, E)    time-major embeddings (single copy, no reverse/concat)
    len_ref : (B, 1)       int32 sequence lengths
    wx_ref  : (E, 8H)  f32 x-side gate weights, columns [g_f g_b|i_f i_b|f_f f_b|o_f o_b]
    wh_ref  : (2H, 8H) bf16 recurrent gate weights, rows [h_fwd(H) | h_bwd(H)],
                            block-diagonal per direction, same column order
    b_ref   : (1, 8H)  f32 combined biases (b_ih + b_hh), same column order
    h_ref   : (B, 2H)  f32 output: [h_fwd_final | h_bwd_final]
    gx_ref  : (T, B, 8H) f32 scratch: precomputed x-side gate pre-activations
    """
    T, B, E = emb_ref.shape
    H2 = h_ref.shape[1]            # 2H  (fwd half | bwd half)
    H = H2 // 2
    G = b_ref.shape[1]             # 8H

    # ---- One-shot input projection (off the serial dependence chain). -----
    # (T*B, E) @ (E, 8H) throughput matmul with bias folded in.
    flat = emb_ref[...].reshape(T * B, E)
    gx = jnp.dot(flat, wx_ref[...], preferred_element_type=jnp.float32)
    gx = gx + jnp.broadcast_to(b_ref[...], (T * B, G))
    gx_ref[...] = gx.reshape(T, B, G)

    wh = wh_ref[...]                                        # (2H, 8H) bf16

    # Hoisted loop invariants (JAX does not CSE broadcasts / iotas).
    len_b = jnp.broadcast_to(len_ref[...], (B, H2))
    col2 = lax.broadcasted_iota(jnp.int32, (B, H2), 1)
    is_fwd2 = col2 < H                                      # (B, 2H) fwd-half mask
    col8 = jnp.concatenate([col2, col2, col2, col2], axis=1)
    is_fwd8 = col8 < H                                      # (B, 8H) fwd-column mask

    def step(t, carry):
        h, c = carry                                        # (B, 2H) f32 each
        rev_t = T - 1 - t
        # x-side pre-activations: fwd columns from step t, bwd from step T-1-t.
        # (pure loads + VPU select, independent of h -> overlapped by scheduler)
        gx_t = jnp.where(is_fwd8, gx_ref[t], gx_ref[rev_t])
        # Recurrent term on the critical path: bf16 MXU operands, f32 accumulate.
        gates = gx_t + jnp.dot(h.astype(jnp.bfloat16), wh,
                               preferred_element_type=jnp.float32)
        # Column order [g | i | f | o]: one 2H tanh + one 6H sigmoid (no waste).
        g_g = jnp.tanh(gates[:, 0:H2])
        sig = jax.nn.sigmoid(gates[:, H2:])
        i_g = sig[:, 0:H2]
        f_g = sig[:, H2:2 * H2]
        o_g = sig[:, 2 * H2:3 * H2]
        c_new = f_g * c + i_g * g_g
        h_new = o_g * jnp.tanh(c_new)
        # pack_padded_sequence semantics: freeze state at padded positions.
        # fwd half valid if t < len, bwd half valid if (T-1-t) < len.
        step_idx = jnp.where(is_fwd2, t, rev_t)
        valid = step_idx < len_b
        return (jnp.where(valid, h_new, h), jnp.where(valid, c_new, c))

    zeros = jnp.zeros((B, H2), jnp.float32)
    unroll = True if T <= 16 else 4        # avoid vreg spills at larger T
    h_fin, _ = lax.fori_loop(0, T, step, (zeros, zeros), unroll=unroll)
    h_ref[...] = h_fin


# ---------------------------------------------------------------------------
# Wrapper (glue in plain JAX: embedding gather, weight fusion, view, FC)
# ---------------------------------------------------------------------------
_VMEM = pl.BlockSpec(memory_space=pltpu.MemorySpace.VMEM)


def _build_fused_weights(params, H):
    """Build wx (E, 8H) f32, wh (2H, 8H) bf16 and b (1, 8H) f32.

    Column order per gate (g, i, f, o); within a gate: [fwd block | bwd block].
    wx rows are the shared embedding features (both directions read the same x;
    the backward time shift is handled inside the kernel).
    wh rows are [h_fwd (H) | h_bwd (H)], block-diagonal per direction.
    PyTorch LSTM weight row blocks are (i, f, g, o) -> indices (2, 0, 1, 3).
    """
    w_ih_f, w_hh_f = params["w_ih_f"], params["w_hh_f"]     # (4H, E), (4H, H)
    w_ih_b, w_hh_b = params["w_ih_b"], params["w_hh_b"]
    zH = jnp.zeros((H, H), jnp.float32)
    bf = params["b_ih_f"] + params["b_hh_f"]
    bb = params["b_ih_b"] + params["b_hh_b"]

    wx_cols, wh_cols, b_parts = [], [], []
    for g in (2, 0, 1, 3):                                  # g, i, f, o
        sl = slice(g * H, (g + 1) * H)
        wx_cols += [w_ih_f[sl].T, w_ih_b[sl].T]
        wh_cols += [jnp.concatenate([w_hh_f[sl].T, zH], axis=0),
                    jnp.concatenate([zH, w_hh_b[sl].T], axis=0)]
        b_parts += [bf[sl], bb[sl]]
    wx = jnp.concatenate(wx_cols, axis=1).astype(jnp.float32)      # (E, 8H)
    wh = jnp.concatenate(wh_cols, axis=1).astype(jnp.bfloat16)     # (2H, 8H)
    b = jnp.concatenate(b_parts)[None, :].astype(jnp.float32)      # (1, 8H)
    return wx, wh, b


def vanilla_bilstm_forward(params, input_ids, attention_mask):
    emb_matrix = params["embedding"]               # (V, E)
    H = params["w_hh_f"].shape[1]                  # w_hh: (4H, H)
    B, T = input_ids.shape
    E = emb_matrix.shape[1]
    G = 8 * H

    # Glue (XLA): embedding lookup + time-major layout only (no reverse/concat).
    emb = jnp.take(emb_matrix, input_ids, axis=0).astype(jnp.float32)     # (B,T,E)
    emb_tbe = jnp.transpose(emb, (1, 0, 2))                               # (T,B,E)
    lengths = jnp.sum(attention_mask, axis=1).astype(jnp.int32)[:, None]  # (B,1)
    wx, wh, b = _build_fused_weights(params, H)

    cost = pl.CostEstimate(
        flops=2 * T * B * E * G + 2 * T * B * (2 * H) * G,
        transcendentals=T * B * 10 * H,
        bytes_accessed=4 * (emb_tbe.size + wx.size + b.size + lengths.size
                            + B * 2 * H) + 2 * wh.size,
    )

    h_both = pl.pallas_call(
        bilstm_kernel,
        out_shape=jax.ShapeDtypeStruct((B, 2 * H), jnp.float32),
        in_specs=[_VMEM, _VMEM, _VMEM, _VMEM, _VMEM],
        out_specs=_VMEM,
        scratch_shapes=[pltpu.VMEM((T, B, G), jnp.float32)],
        cost_estimate=cost,
    )(emb_tbe, lengths, wx, wh, b)

    # final_hidden_state has shape (2, B, H); reproduce the raw .view(B, -1).
    hf, hb = h_both[:, :H], h_both[:, H:]
    final_view = jnp.reshape(jnp.stack([hf, hb], axis=0), (B, 2 * H))

    # Tiny FC left to plain XLA (a separate pallas_call is pure overhead here).
    return final_view @ params["w_fc"].T + params["b_fc"][None, :]


# ---------------------------------------------------------------------------
# Pure-JAX reference (for correctness check only)
# ---------------------------------------------------------------------------
def _reference_forward(params, input_ids, attention_mask):
    H = params["w_hh_f"].shape[1]
    B, T = input_ids.shape
    emb = jnp.take(params["embedding"], input_ids, axis=0)      # (B, T, E)
    lengths = jnp.sum(attention_mask, axis=1)
    mask = (jnp.arange(T)[None, :] < lengths[:, None]).astype(jnp.float32)

    def cell(x_t, m_t, h, c, wih, whh, b):
        gates = x_t @ wih.T + h @ whh.T + b
        i = jax.nn.sigmoid(gates[:, :H])
        f = jax.nn.sigmoid(gates[:, H:2 * H])
        g = jnp.tanh(gates[:, 2 * H:3 * H])
        o = jax.nn.sigmoid(gates[:, 3 * H:])
        c_new = f * c + i * g
        h_new = o * jnp.tanh(c_new)
        m = m_t[:, None]
        return m * h_new + (1 - m) * h, m * c_new + (1 - m) * c

    h = c = jnp.zeros((B, H), jnp.float32)
    for t in range(T):
        h, c = cell(emb[:, t], mask[:, t], h, c,
                    params["w_ih_f"], params["w_hh_f"],
                    params["b_ih_f"] + params["b_hh_f"])
    hf = h
    h = c = jnp.zeros((B, H), jnp.float32)
    for t in range(T - 1, -1, -1):
        h, c = cell(emb[:, t], mask[:, t], h, c,
                    params["w_ih_b"], params["w_hh_b"],
                    params["b_ih_b"] + params["b_hh_b"])
    hb = h
    final_view = jnp.reshape(jnp.stack([hf, hb], axis=0), (B, 2 * H))
    return final_view @ params["w_fc"].T + params["b_fc"]


# ---------------------------------------------------------------------------
# Main
# ---------------------------------------------------------------------------
if __name__ == "__main__":
    V, E, H, B, T, O = 50, 32, 32, 8, 10, 1

    key = jax.random.PRNGKey(0)
    ks = jax.random.split(key, 12)
    init = lambda k, shape, s=0.1: (s * jax.random.normal(k, shape)).astype(jnp.float32)

    params = {
        "embedding": init(ks[0], (V, E), 1.0),
        "w_ih_f": init(ks[1], (4 * H, E)),
        "w_hh_f": init(ks[2], (4 * H, H)),
        "b_ih_f": init(ks[3], (4 * H,)),
        "b_hh_f": init(ks[4], (4 * H,)),
        "w_ih_b": init(ks[5], (4 * H, E)),
        "w_hh_b": init(ks[6], (4 * H, H)),
        "b_ih_b": init(ks[7], (4 * H,)),
        "b_hh_b": init(ks[8], (4 * H,)),
        "w_fc":   init(ks[9], (O, 2 * H)),
        "b_fc":   init(ks[10], (O,)),
    }

    input_ids = jax.random.randint(ks[11], (B, T), 0, V, dtype=jnp.int32)
    lengths = jnp.array([10, 7, 3, 10, 5, 1, 8, 6], dtype=jnp.int32)
    attention_mask = (jnp.arange(T)[None, :] < lengths[:, None]).astype(jnp.int32)

    out = jax.jit(vanilla_bilstm_forward)(params, input_ids, attention_mask)
    out = jax.block_until_ready(out)

    ref = _reference_forward(params, input_ids, attention_mask)
    # Tolerance loosened from 1e-4 because the recurrent h @ W_h uses bf16 MXU
    # operands (f32 accumulate), per the performance review's correctness note.
    np.testing.assert_allclose(np.asarray(out), np.asarray(ref), atol=1e-2, rtol=1e-2)

    assert out.shape == (B, O)
    print("KERNEL_OK")
</pallas_src>

<mosaic_0001>
module attributes {stable_mosaic.version = 11 : i64} {
  func.func @bilstm_kernel(%arg0: memref<10x8x32xf32, #tpu.memory_space<vmem>>, %arg1: memref<8x1xi32, #tpu.memory_space<vmem>>, %arg2: memref<32x256xf32, #tpu.memory_space<vmem>>, %arg3: memref<64x256xbf16, #tpu.memory_space<vmem>>, %arg4: memref<1x256xf32, #tpu.memory_space<vmem>>, %arg5: memref<8x64xf32, #tpu.memory_space<vmem>>, %arg6: memref<10x8x256xf32, #tpu.memory_space<vmem>>) attributes {dimension_semantics = [], scalar_prefetch = 0 : i64, scratch_operands = 1 : i64, tpu.core_type = #tpu.core_type<tc>} {
    %c0 = arith.constant 0 : index
    %c0_0 = arith.constant 0 : index
    %c0_1 = arith.constant 0 : index
    %0 = vector.load %arg0[%c0, %c0_0, %c0_1] : memref<10x8x32xf32, #tpu.memory_space<vmem>>, vector<10x8x32xf32>
    %1 = vector.shape_cast %0 : vector<10x8x32xf32> to vector<80x32xf32>
    %c0_2 = arith.constant 0 : index
    %c0_3 = arith.constant 0 : index
    %2 = vector.load %arg2[%c0_2, %c0_3] : memref<32x256xf32, #tpu.memory_space<vmem>>, vector<32x256xf32>
    %cst = arith.constant dense<0.000000e+00> : vector<80x256xf32>
    %3 = tpu.matmul %1, %2, %cst {dimension_numbers = #tpu.dot_dimension_numbers<[1], [0], [0], [1], [0, 0, 1, 1], [], []>} : vector<80x32xf32>, vector<32x256xf32>, vector<80x256xf32> -> vector<80x256xf32>
    %c0_4 = arith.constant 0 : index
    %c0_5 = arith.constant 0 : index
    %4 = vector.load %arg4[%c0_4, %c0_5] : memref<1x256xf32, #tpu.memory_space<vmem>>, vector<1x256xf32>
    %5 = vector.shape_cast %4 : vector<1x256xf32> to vector<1x256xf32>
    %6 = vector.broadcast %5 : vector<1x256xf32> to vector<80x256xf32>
    %7 = arith.addf %3, %6 : vector<80x256xf32>
    %8 = vector.shape_cast %7 : vector<80x256xf32> to vector<10x8x256xf32>
    %c0_6 = arith.constant 0 : index
    %c0_7 = arith.constant 0 : index
    %c0_8 = arith.constant 0 : index
    %9 = vector.load %arg6[%c0_6, %c0_7, %c0_8] : memref<10x8x256xf32, #tpu.memory_space<vmem>>, vector<10x8x256xf32>
    tpu.vector_store %arg6[%c0_6, %c0_7, %c0_8], %8 {strides = array<i32>} : memref<10x8x256xf32, #tpu.memory_space<vmem>>, vector<10x8x256xf32>,
    %c0_9 = arith.constant 0 : index
    %c0_10 = arith.constant 0 : index
    %10 = vector.load %arg3[%c0_9, %c0_10] : memref<64x256xbf16, #tpu.memory_space<vmem>>, vector<64x256xbf16>
    %c0_11 = arith.constant 0 : index
    %c0_12 = arith.constant 0 : index
    %11 = vector.load %arg1[%c0_11, %c0_12] : memref<8x1xi32, #tpu.memory_space<vmem>>, vector<8x1xi32>
    %12 = vector.shape_cast %11 : vector<8x1xi32> to vector<8x1xi32>
    %13 = vector.broadcast %12 : vector<8x1xi32> to vector<8x64xi32>
    %14 = tpu.iota {dimensions = array<i32: 1>} : vector<8x64xi32>
    %c32_i32 = arith.constant 32 : i32
    %15 = vector.broadcast %c32_i32 : i32 to vector<8x64xi32>
    %16 = arith.cmpi slt, %14, %15 : vector<8x64xi32>
    %17 = tpu.concatenate %14, %14, %14, %14 in 1 : vector<8x64xi32>, vector<8x64xi32>, vector<8x64xi32>, vector<8x64xi32> -> vector<8x256xi32>
    %c32_i32_13 = arith.constant 32 : i32
    %18 = vector.broadcast %c32_i32_13 : i32 to vector<8x256xi32>
    %19 = arith.cmpi slt, %17, %18 : vector<8x256xi32>
    %cst_14 = arith.constant 0.000000e+00 : f32
    %20 = vector.broadcast %cst_14 : f32 to vector<8x64xf32>
    %c0_i32 = arith.constant 0 : i32
    %c9_i32 = arith.constant 9 : i32
    %21 = arith.subi %c9_i32, %c0_i32 : i32
    %22 = arith.index_cast %c0_i32 : i32 to index
    %c0_15 = arith.constant 0 : index
    %c0_16 = arith.constant 0 : index
    %23 = vector.load %arg6[%22, %c0_15, %c0_16] : memref<10x8x256xf32, #tpu.memory_space<vmem>>, vector<1x8x256xf32>
    %24 = vector.shape_cast %23 : vector<1x8x256xf32> to vector<8x256xf32>
    %25 = arith.index_cast %21 : i32 to index
    %c0_17 = arith.constant 0 : index
    %c0_18 = arith.constant 0 : index
    %26 = vector.load %arg6[%25, %c0_17, %c0_18] : memref<10x8x256xf32, #tpu.memory_space<vmem>>, vector<1x8x256xf32>
    %27 = vector.shape_cast %26 : vector<1x8x256xf32> to vector<8x256xf32>
    %28 = arith.select %19, %24, %27 : vector<8x256xi1>, vector<8x256xf32>
    %29 = arith.truncf %20 : vector<8x64xf32> to vector<8x64xbf16>
    %cst_19 = arith.constant dense<0.000000e+00> : vector<8x256xf32>
    %30 = tpu.matmul %29, %10, %cst_19 {dimension_numbers = #tpu.dot_dimension_numbers<[1], [0], [0], [1], [0, 0, 1, 1], [], []>} : vector<8x64xbf16>, vector<64x256xbf16>, vector<8x256xf32> -> vector<8x256xf32>
    %31 = arith.addf %28, %30 : vector<8x256xf32>
    %32 = vector.extract_strided_slice %31 {offsets = [0, 0], sizes = [8, 64], strides = [1, 1]} : vector<8x256xf32> to vector<8x64xf32>
    %33 = math.tanh %32 : vector<8x64xf32>
    %34 = vector.extract_strided_slice %31 {offsets = [0, 64], sizes = [8, 192], strides = [1, 1]} : vector<8x256xf32> to vector<8x192xf32>
    %35 = arith.negf %34 : vector<8x192xf32>
    %36 = math.exp %35 : vector<8x192xf32>
    %cst_20 = arith.constant 1.000000e+00 : f32
    %37 = vector.broadcast %cst_20 : f32 to vector<8x192xf32>
    %38 = arith.addf %37, %36 : vector<8x192xf32>
    %39 = arith.divf %37, %38 : vector<8x192xf32>
    %40 = vector.extract_strided_slice %39 {offsets = [0, 0], sizes = [8, 64], strides = [1, 1]} : vector<8x192xf32> to vector<8x64xf32>
    %41 = vector.extract_strided_slice %39 {offsets = [0, 64], sizes = [8, 64], strides = [1, 1]} : vector<8x192xf32> to vector<8x64xf32>
    %42 = vector.extract_strided_slice %39 {offsets = [0, 128], sizes = [8, 64], strides = [1, 1]} : vector<8x192xf32> to vector<8x64xf32>
    %43 = arith.mulf %41, %20 : vector<8x64xf32>
    %44 = arith.mulf %40, %33 : vector<8x64xf32>
    %45 = arith.addf %43, %44 : vector<8x64xf32>
    %46 = math.tanh %45 : vector<8x64xf32>
    %47 = arith.mulf %42, %46 : vector<8x64xf32>
    %48 = vector.broadcast %c0_i32 : i32 to vector<8x64xi32>
    %49 = vector.broadcast %21 : i32 to vector<8x64xi32>
    %50 = arith.select %16, %48, %49 : vector<8x64xi1>, vector<8x64xi32>
    %51 = arith.cmpi slt, %50, %13 : vector<8x64xi32>
    %52 = arith.select %51, %47, %20 : vector<8x64xi1>, vector<8x64xf32>
    %53 = arith.select %51, %45, %20 : vector<8x64xi1>, vector<8x64xf32>
    %c1_i32 = arith.constant 1 : i32
    %c9_i32_21 = arith.constant 9 : i32
    %54 = arith.subi %c9_i32_21, %c1_i32 : i32
    %55 = arith.index_cast %c1_i32 : i32 to index
    %c0_22 = arith.constant 0 : index
    %c0_23 = arith.constant 0 : index
    %56 = vector.load %arg6[%55, %c0_22, %c0_23] : memref<10x8x256xf32, #tpu.memory_space<vmem>>, vector<1x8x256xf32>
    %57 = vector.shape_cast %56 : vector<1x8x256xf32> to vector<8x256xf32>
    %58 = arith.index_cast %54 : i32 to index
    %c0_24 = arith.constant 0 : index
    %c0_25 = arith.constant 0 : index
    %59 = vector.load %arg6[%58, %c0_24, %c0_25] : memref<10x8x256xf32, #tpu.memory_space<vmem>>, vector<1x8x256xf32>
    %60 = vector.shape_cast %59 : vector<1x8x256xf32> to vector<8x256xf32>
    %61 = arith.select %19, %57, %60 : vector<8x256xi1>, vector<8x256xf32>
    %62 = arith.truncf %52 : vector<8x64xf32> to vector<8x64xbf16>
    %cst_26 = arith.constant dense<0.000000e+00> : vector<8x256xf32>
    %63 = tpu.matmul %62, %10, %cst_26 {dimension_numbers = #tpu.dot_dimension_numbers<[1], [0], [0], [1], [0, 0, 1, 1], [], []>} : vector<8x64xbf16>, vector<64x256xbf16>, vector<8x256xf32> -> vector<8x256xf32>
    %64 = arith.addf %61, %63 : vector<8x256xf32>
    %65 = vector.extract_strided_slice %64 {offsets = [0, 0], sizes = [8, 64], strides = [1, 1]} : vector<8x256xf32> to vector<8x64xf32>
    %66 = math.tanh %65 : vector<8x64xf32>
    %67 = vector.extract_strided_slice %64 {offsets = [0, 64], sizes = [8, 192], strides = [1, 1]} : vector<8x256xf32> to vector<8x192xf32>
    %68 = arith.negf %67 : vector<8x192xf32>
    %69 = math.exp %68 : vector<8x192xf32>
    %cst_27 = arith.constant 1.000000e+00 : f32
    %70 = vector.broadcast %cst_27 : f32 to vector<8x192xf32>
    %71 = arith.addf %70, %69 : vector<8x192xf32>
    %72 = arith.divf %70, %71 : vector<8x192xf32>
    %73 = vector.extract_strided_slice %72 {offsets = [0, 0], sizes = [8, 64], strides = [1, 1]} : vector<8x192xf32> to vector<8x64xf32>
    %74 = vector.extract_strided_slice %72 {offsets = [0, 64], sizes = [8, 64], strides = [1, 1]} : vector<8x192xf32> to vector<8x64xf32>
    %75 = vector.extract_strided_slice %72 {offsets = [0, 128], sizes = [8, 64], strides = [1, 1]} : vector<8x192xf32> to vector<8x64xf32>
    %76 = arith.mulf %74, %53 : vector<8x64xf32>
    %77 = arith.mulf %73, %66 : vector<8x64xf32>
    %78 = arith.addf %76, %77 : vector<8x64xf32>
    %79 = math.tanh %78 : vector<8x64xf32>
    %80 = arith.mulf %75, %79 : vector<8x64xf32>
    %81 = vector.broadcast %c1_i32 : i32 to vector<8x64xi32>
    %82 = vector.broadcast %54 : i32 to vector<8x64xi32>
    %83 = arith.select %16, %81, %82 : vector<8x64xi1>, vector<8x64xi32>
    %84 = arith.cmpi slt, %83, %13 : vector<8x64xi32>
    %85 = arith.select %84, %80, %52 : vector<8x64xi1>, vector<8x64xf32>
    %86 = arith.select %84, %78, %53 : vector<8x64xi1>, vector<8x64xf32>
    %c2_i32 = arith.constant 2 : i32
    %c9_i32_28 = arith.constant 9 : i32
    %87 = arith.subi %c9_i32_28, %c2_i32 : i32
    %88 = arith.index_cast %c2_i32 : i32 to index
    %c0_29 = arith.constant 0 : index
    %c0_30 = arith.constant 0 : index
    %89 = vector.load %arg6[%88, %c0_29, %c0_30] : memref<10x8x256xf32, #tpu.memory_space<vmem>>, vector<1x8x256xf32>
    %90 = vector.shape_cast %89 : vector<1x8x256xf32> to vector<8x256xf32>
    %91 = arith.index_cast %87 : i32 to index
    %c0_31 = arith.constant 0 : index
    %c0_32 = arith.constant 0 : index
    %92 = vector.load %arg6[%91, %c0_31, %c0_32] : memref<10x8x256xf32, #tpu.memory_space<vmem>>, vector<1x8x256xf32>
    %93 = vector.shape_cast %92 : vector<1x8x256xf32> to vector<8x256xf32>
    %94 = arith.select %19, %90, %93 : vector<8x256xi1>, vector<8x256xf32>
    %95 = arith.truncf %85 : vector<8x64xf32> to vector<8x64xbf16>
    %cst_33 = arith.constant dense<0.000000e+00> : vector<8x256xf32>
    %96 = tpu.matmul %95, %10, %cst_33 {dimension_numbers = #tpu.dot_dimension_numbers<[1], [0], [0], [1], [0, 0, 1, 1], [], []>} : vector<8x64xbf16>, vector<64x256xbf16>, vector<8x256xf32> -> vector<8x256xf32>
    %97 = arith.addf %94, %96 : vector<8x256xf32>
    %98 = vector.extract_strided_slice %97 {offsets = [0, 0], sizes = [8, 64], strides = [1, 1]} : vector<8x256xf32> to vector<8x64xf32>
    %99 = math.tanh %98 : vector<8x64xf32>
    %100 = vector.extract_strided_slice %97 {offsets = [0, 64], sizes = [8, 192], strides = [1, 1]} : vector<8x256xf32> to vector<8x192xf32>
    %101 = arith.negf %100 : vector<8x192xf32>
    %102 = math.exp %101 : vector<8x192xf32>
    %cst_34 = arith.constant 1.000000e+00 : f32
    %103 = vector.broadcast %cst_34 : f32 to vector<8x192xf32>
    %104 = arith.addf %103, %102 : vector<8x192xf32>
    %105 = arith.divf %103, %104 : vector<8x192xf32>
    %106 = vector.extract_strided_slice %105 {offsets = [0, 0], sizes = [8, 64], strides = [1, 1]} : vector<8x192xf32> to vector<8x64xf32>
    %107 = vector.extract_strided_slice %105 {offsets = [0, 64], sizes = [8, 64], strides = [1, 1]} : vector<8x192xf32> to vector<8x64xf32>
    %108 = vector.extract_strided_slice %105 {offsets = [0, 128], sizes = [8, 64], strides = [1, 1]} : vector<8x192xf32> to vector<8x64xf32>
    %109 = arith.mulf %107, %86 : vector<8x64xf32>
    %110 = arith.mulf %106, %99 : vector<8x64xf32>
    %111 = arith.addf %109, %110 : vector<8x64xf32>
    %112 = math.tanh %111 : vector<8x64xf32>
    %113 = arith.mulf %108, %112 : vector<8x64xf32>
    %114 = vector.broadcast %c2_i32 : i32 to vector<8x64xi32>
    %115 = vector.broadcast %87 : i32 to vector<8x64xi32>
    %116 = arith.select %16, %114, %115 : vector<8x64xi1>, vector<8x64xi32>
    %117 = arith.cmpi slt, %116, %13 : vector<8x64xi32>
    %118 = arith.select %117, %113, %85 : vector<8x64xi1>, vector<8x64xf32>
    %119 = arith.select %117, %111, %86 : vector<8x64xi1>, vector<8x64xf32>
    %c3_i32 = arith.constant 3 : i32
    %c9_i32_35 = arith.constant 9 : i32
    %120 = arith.subi %c9_i32_35, %c3_i32 : i32
    %121 = arith.index_cast %c3_i32 : i32 to index
    %c0_36 = arith.constant 0 : index
    %c0_37 = arith.constant 0 : index
    %122 = vector.load %arg6[%121, %c0_36, %c0_37] : memref<10x8x256xf32, #tpu.memory_space<vmem>>, vector<1x8x256xf32>
    %123 = vector.shape_cast %122 : vector<1x8x256xf32> to vector<8x256xf32>
    %124 = arith.index_cast %120 : i32 to index
    %c0_38 = arith.constant 0 : index
    %c0_39 = arith.constant 0 : index
    %125 = vector.load %arg6[%124, %c0_38, %c0_39] : memref<10x8x256xf32, #tpu.memory_space<vmem>>, vector<1x8x256xf32>
    %126 = vector.shape_cast %125 : vector<1x8x256xf32> to vector<8x256xf32>
    %127 = arith.select %19, %123, %126 : vector<8x256xi1>, vector<8x256xf32>
    %128 = arith.truncf %118 : vector<8x64xf32> to vector<8x64xbf16>
    %cst_40 = arith.constant dense<0.000000e+00> : vector<8x256xf32>
    %129 = tpu.matmul %128, %10, %cst_40 {dimension_numbers = #tpu.dot_dimension_numbers<[1], [0], [0], [1], [0, 0, 1, 1], [], []>} : vector<8x64xbf16>, vector<64x256xbf16>, vector<8x256xf32> -> vector<8x256xf32>
    %130 = arith.addf %127, %129 : vector<8x256xf32>
    %131 = vector.extract_strided_slice %130 {offsets = [0, 0], sizes = [8, 64], strides = [1, 1]} : vector<8x256xf32> to vector<8x64xf32>
    %132 = math.tanh %131 : vector<8x64xf32>
    %133 = vector.extract_strided_slice %130 {offsets = [0, 64], sizes = [8, 192], strides = [1, 1]} : vector<8x256xf32> to vector<8x192xf32>
    %134 = arith.negf %133 : vector<8x192xf32>
    %135 = math.exp %134 : vector<8x192xf32>
    %cst_41 = arith.constant 1.000000e+00 : f32
    %136 = vector.broadcast %cst_41 : f32 to vector<8x192xf32>
    %137 = arith.addf %136, %135 : vector<8x192xf32>
    %138 = arith.divf %136, %137 : vector<8x192xf32>
    %139 = vector.extract_strided_slice %138 {offsets = [0, 0], sizes = [8, 64], strides = [1, 1]} : vector<8x192xf32> to vector<8x64xf32>
    %140 = vector.extract_strided_slice %138 {offsets = [0, 64], sizes = [8, 64], strides = [1, 1]} : vector<8x192xf32> to vector<8x64xf32>
    %141 = vector.extract_strided_slice %138 {offsets = [0, 128], sizes = [8, 64], strides = [1, 1]} : vector<8x192xf32> to vector<8x64xf32>
    %142 = arith.mulf %140, %119 : vector<8x64xf32>
    %143 = arith.mulf %139, %132 : vector<8x64xf32>
    %144 = arith.addf %142, %143 : vector<8x64xf32>
    %145 = math.tanh %144 : vector<8x64xf32>
    %146 = arith.mulf %141, %145 : vector<8x64xf32>
    %147 = vector.broadcast %c3_i32 : i32 to vector<8x64xi32>
    %148 = vector.broadcast %120 : i32 to vector<8x64xi32>
    %149 = arith.select %16, %147, %148 : vector<8x64xi1>, vector<8x64xi32>
    %150 = arith.cmpi slt, %149, %13 : vector<8x64xi32>
    %151 = arith.select %150, %146, %118 : vector<8x64xi1>, vector<8x64xf32>
    %152 = arith.select %150, %144, %119 : vector<8x64xi1>, vector<8x64xf32>
    %c4_i32 = arith.constant 4 : i32
    %c9_i32_42 = arith.constant 9 : i32
    %153 = arith.subi %c9_i32_42, %c4_i32 : i32
    %154 = arith.index_cast %c4_i32 : i32 to index
    %c0_43 = arith.constant 0 : index
    %c0_44 = arith.constant 0 : index
    %155 = vector.load %arg6[%154, %c0_43, %c0_44] : memref<10x8x256xf32, #tpu.memory_space<vmem>>, vector<1x8x256xf32>
    %156 = vector.shape_cast %155 : vector<1x8x256xf32> to vector<8x256xf32>
    %157 = arith.index_cast %153 : i32 to index
    %c0_45 = arith.constant 0 : index
    %c0_46 = arith.constant 0 : index
    %158 = vector.load %arg6[%157, %c0_45, %c0_46] : memref<10x8x256xf32, #tpu.memory_space<vmem>>, vector<1x8x256xf32>
    %159 = vector.shape_cast %158 : vector<1x8x256xf32> to vector<8x256xf32>
    %160 = arith.select %19, %156, %159 : vector<8x256xi1>, vector<8x256xf32>
    %161 = arith.truncf %151 : vector<8x64xf32> to vector<8x64xbf16>
    %cst_47 = arith.constant dense<0.000000e+00> : vector<8x256xf32>
    %162 = tpu.matmul %161, %10, %cst_47 {dimension_numbers = #tpu.dot_dimension_numbers<[1], [0], [0], [1], [0, 0, 1, 1], [], []>} : vector<8x64xbf16>, vector<64x256xbf16>, vector<8x256xf32> -> vector<8x256xf32>
    %163 = arith.addf %160, %162 : vector<8x256xf32>
    %164 = vector.extract_strided_slice %163 {offsets = [0, 0], sizes = [8, 64], strides = [1, 1]} : vector<8x256xf32> to vector<8x64xf32>
    %165 = math.tanh %164 : vector<8x64xf32>
    %166 = vector.extract_strided_slice %163 {offsets = [0, 64], sizes = [8, 192], strides = [1, 1]} : vector<8x256xf32> to vector<8x192xf32>
    %167 = arith.negf %166 : vector<8x192xf32>
    %168 = math.exp %167 : vector<8x192xf32>
    %cst_48 = arith.constant 1.000000e+00 : f32
    %169 = vector.broadcast %cst_48 : f32 to vector<8x192xf32>
    %170 = arith.addf %169, %168 : vector<8x192xf32>
    %171 = arith.divf %169, %170 : vector<8x192xf32>
    %172 = vector.extract_strided_slice %171 {offsets = [0, 0], sizes = [8, 64], strides = [1, 1]} : vector<8x192xf32> to vector<8x64xf32>
    %173 = vector.extract_strided_slice %171 {offsets = [0, 64], sizes = [8, 64], strides = [1, 1]} : vector<8x192xf32> to vector<8x64xf32>
    %174 = vector.extract_strided_slice %171 {offsets = [0, 128], sizes = [8, 64], strides = [1, 1]} : vector<8x192xf32> to vector<8x64xf32>
    %175 = arith.mulf %173, %152 : vector<8x64xf32>
    %176 = arith.mulf %172, %165 : vector<8x64xf32>
    %177 = arith.addf %175, %176 : vector<8x64xf32>
    %178 = math.tanh %177 : vector<8x64xf32>
    %179 = arith.mulf %174, %178 : vector<8x64xf32>
    %180 = vector.broadcast %c4_i32 : i32 to vector<8x64xi32>
    %181 = vector.broadcast %153 : i32 to vector<8x64xi32>
    %182 = arith.select %16, %180, %181 : vector<8x64xi1>, vector<8x64xi32>
    %183 = arith.cmpi slt, %182, %13 : vector<8x64xi32>
    %184 = arith.select %183, %179, %151 : vector<8x64xi1>, vector<8x64xf32>
    %185 = arith.select %183, %177, %152 : vector<8x64xi1>, vector<8x64xf32>
    %c5_i32 = arith.constant 5 : i32
    %c9_i32_49 = arith.constant 9 : i32
    %186 = arith.subi %c9_i32_49, %c5_i32 : i32
    %187 = arith.index_cast %c5_i32 : i32 to index
    %c0_50 = arith.constant 0 : index
    %c0_51 = arith.constant 0 : index
    %188 = vector.load %arg6[%187, %c0_50, %c0_51] : memref<10x8x256xf32, #tpu.memory_space<vmem>>, vector<1x8x256xf32>
    %189 = vector.shape_cast %188 : vector<1x8x256xf32> to vector<8x256xf32>
    %190 = arith.index_cast %186 : i32 to index
    %c0_52 = arith.constant 0 : index
    %c0_53 = arith.constant 0 : index
    %191 = vector.load %arg6[%190, %c0_52, %c0_53] : memref<10x8x256xf32, #tpu.memory_space<vmem>>, vector<1x8x256xf32>
    %192 = vector.shape_cast %191 : vector<1x8x256xf32> to vector<8x256xf32>
    %193 = arith.select %19, %189, %192 : vector<8x256xi1>, vector<8x256xf32>
    %194 = arith.truncf %184 : vector<8x64xf32> to vector<8x64xbf16>
    %cst_54 = arith.constant dense<0.000000e+00> : vector<8x256xf32>
    %195 = tpu.matmul %194, %10, %cst_54 {dimension_numbers = #tpu.dot_dimension_numbers<[1], [0], [0], [1], [0, 0, 1, 1], [], []>} : vector<8x64xbf16>, vector<64x256xbf16>, vector<8x256xf32> -> vector<8x256xf32>
    %196 = arith.addf %193, %195 : vector<8x256xf32>
    %197 = vector.extract_strided_slice %196 {offsets = [0, 0], sizes = [8, 64], strides = [1, 1]} : vector<8x256xf32> to vector<8x64xf32>
    %198 = math.tanh %197 : vector<8x64xf32>
    %199 = vector.extract_strided_slice %196 {offsets = [0, 64], sizes = [8, 192], strides = [1, 1]} : vector<8x256xf32> to vector<8x192xf32>
    %200 = arith.negf %199 : vector<8x192xf32>
    %201 = math.exp %200 : vector<8x192xf32>
    %cst_55 = arith.constant 1.000000e+00 : f32
    %202 = vector.broadcast %cst_55 : f32 to vector<8x192xf32>
    %203 = arith.addf %202, %201 : vector<8x192xf32>
    %204 = arith.divf %202, %203 : vector<8x192xf32>
    %205 = vector.extract_strided_slice %204 {offsets = [0, 0], sizes = [8, 64], strides = [1, 1]} : vector<8x192xf32> to vector<8x64xf32>
    %206 = vector.extract_strided_slice %204 {offsets = [0, 64], sizes = [8, 64], strides = [1, 1]} : vector<8x192xf32> to vector<8x64xf32>
    %207 = vector.extract_strided_slice %204 {offsets = [0, 128], sizes = [8, 64], strides = [1, 1]} : vector<8x192xf32> to vector<8x64xf32>
    %208 = arith.mulf %206, %185 : vector<8x64xf32>
    %209 = arith.mulf %205, %198 : vector<8x64xf32>
    %210 = arith.addf %208, %209 : vector<8x64xf32>
    %211 = math.tanh %210 : vector<8x64xf32>
    %212 = arith.mulf %207, %211 : vector<8x64xf32>
    %213 = vector.broadcast %c5_i32 : i32 to vector<8x64xi32>
    %214 = vector.broadcast %186 : i32 to vector<8x64xi32>
    %215 = arith.select %16, %213, %214 : vector<8x64xi1>, vector<8x64xi32>
    %216 = arith.cmpi slt, %215, %13 : vector<8x64xi32>
    %217 = arith.select %216, %212, %184 : vector<8x64xi1>, vector<8x64xf32>
    %218 = arith.select %216, %210, %185 : vector<8x64xi1>, vector<8x64xf32>
    %c6_i32 = arith.constant 6 : i32
    %c9_i32_56 = arith.constant 9 : i32
    %219 = arith.subi %c9_i32_56, %c6_i32 : i32
    %220 = arith.index_cast %c6_i32 : i32 to index
    %c0_57 = arith.constant 0 : index
    %c0_58 = arith.constant 0 : index
    %221 = vector.load %arg6[%220, %c0_57, %c0_58] : memref<10x8x256xf32, #tpu.memory_space<vmem>>, vector<1x8x256xf32>
    %222 = vector.shape_cast %221 : vector<1x8x256xf32> to vector<8x256xf32>
    %223 = arith.index_cast %219 : i32 to index
    %c0_59 = arith.constant 0 : index
    %c0_60 = arith.constant 0 : index
    %224 = vector.load %arg6[%223, %c0_59, %c0_60] : memref<10x8x256xf32, #tpu.memory_space<vmem>>, vector<1x8x256xf32>
    %225 = vector.shape_cast %224 : vector<1x8x256xf32> to vector<8x256xf32>
    %226 = arith.select %19, %222, %225 : vector<8x256xi1>, vector<8x256xf32>
    %227 = arith.truncf %217 : vector<8x64xf32> to vector<8x64xbf16>
    %cst_61 = arith.constant dense<0.000000e+00> : vector<8x256xf32>
    %228 = tpu.matmul %227, %10, %cst_61 {dimension_numbers = #tpu.dot_dimension_numbers<[1], [0], [0], [1], [0, 0, 1, 1], [], []>} : vector<8x64xbf16>, vector<64x256xbf16>, vector<8x256xf32> -> vector<8x256xf32>
    %229 = arith.addf %226, %228 : vector<8x256xf32>
    %230 = vector.extract_strided_slice %229 {offsets = [0, 0], sizes = [8, 64], strides = [1, 1]} : vector<8x256xf32> to vector<8x64xf32>
    %231 = math.tanh %230 : vector<8x64xf32>
    %232 = vector.extract_strided_slice %229 {offsets = [0, 64], sizes = [8, 192], strides = [1, 1]} : vector<8x256xf32> to vector<8x192xf32>
    %233 = arith.negf %232 : vector<8x192xf32>
    %234 = math.exp %233 : vector<8x192xf32>
    %cst_62 = arith.constant 1.000000e+00 : f32
    %235 = vector.broadcast %cst_62 : f32 to vector<8x192xf32>
    %236 = arith.addf %235, %234 : vector<8x192xf32>
    %237 = arith.divf %235, %236 : vector<8x192xf32>
    %238 = vector.extract_strided_slice %237 {offsets = [0, 0], sizes = [8, 64], strides = [1, 1]} : vector<8x192xf32> to vector<8x64xf32>
    %239 = vector.extract_strided_slice %237 {offsets = [0, 64], sizes = [8, 64], strides = [1, 1]} : vector<8x192xf32> to vector<8x64xf32>
    %240 = vector.extract_strided_slice %237 {offsets = [0, 128], sizes = [8, 64], strides = [1, 1]} : vector<8x192xf32> to vector<8x64xf32>
    %241 = arith.mulf %239, %218 : vector<8x64xf32>
    %242 = arith.mulf %238, %231 : vector<8x64xf32>
    %243 = arith.addf %241, %242 : vector<8x64xf32>
    %244 = math.tanh %243 : vector<8x64xf32>
    %245 = arith.mulf %240, %244 : vector<8x64xf32>
    %246 = vector.broadcast %c6_i32 : i32 to vector<8x64xi32>
    %247 = vector.broadcast %219 : i32 to vector<8x64xi32>
    %248 = arith.select %16, %246, %247 : vector<8x64xi1>, vector<8x64xi32>
    %249 = arith.cmpi slt, %248, %13 : vector<8x64xi32>
    %250 = arith.select %249, %245, %217 : vector<8x64xi1>, vector<8x64xf32>
    %251 = arith.select %249, %243, %218 : vector<8x64xi1>, vector<8x64xf32>
    %c7_i32 = arith.constant 7 : i32
    %c9_i32_63 = arith.constant 9 : i32
    %252 = arith.subi %c9_i32_63, %c7_i32 : i32
    %253 = arith.index_cast %c7_i32 : i32 to index
    %c0_64 = arith.constant 0 : index
    %c0_65 = arith.constant 0 : index
    %254 = vector.load %arg6[%253, %c0_64, %c0_65] : memref<10x8x256xf32, #tpu.memory_space<vmem>>, vector<1x8x256xf32>
    %255 = vector.shape_cast %254 : vector<1x8x256xf32> to vector<8x256xf32>
    %256 = arith.index_cast %252 : i32 to index
    %c0_66 = arith.constant 0 : index
    %c0_67 = arith.constant 0 : index
    %257 = vector.load %arg6[%256, %c0_66, %c0_67] : memref<10x8x256xf32, #tpu.memory_space<vmem>>, vector<1x8x256xf32>
    %258 = vector.shape_cast %257 : vector<1x8x256xf32> to vector<8x256xf32>
    %259 = arith.select %19, %255, %258 : vector<8x256xi1>, vector<8x256xf32>
    %260 = arith.truncf %250 : vector<8x64xf32> to vector<8x64xbf16>
    %cst_68 = arith.constant dense<0.000000e+00> : vector<8x256xf32>
    %261 = tpu.matmul %260, %10, %cst_68 {dimension_numbers = #tpu.dot_dimension_numbers<[1], [0], [0], [1], [0, 0, 1, 1], [], []>} : vector<8x64xbf16>, vector<64x256xbf16>, vector<8x256xf32> -> vector<8x256xf32>
    %262 = arith.addf %259, %261 : vector<8x256xf32>
    %263 = vector.extract_strided_slice %262 {offsets = [0, 0], sizes = [8, 64], strides = [1, 1]} : vector<8x256xf32> to vector<8x64xf32>
    %264 = math.tanh %263 : vector<8x64xf32>
    %265 = vector.extract_strided_slice %262 {offsets = [0, 64], sizes = [8, 192], strides = [1, 1]} : vector<8x256xf32> to vector<8x192xf32>
    %266 = arith.negf %265 : vector<8x192xf32>
    %267 = math.exp %266 : vector<8x192xf32>
    %cst_69 = arith.constant 1.000000e+00 : f32
    %268 = vector.broadcast %cst_69 : f32 to vector<8x192xf32>
    %269 = arith.addf %268, %267 : vector<8x192xf32>
    %270 = arith.divf %268, %269 : vector<8x192xf32>
    %271 = vector.extract_strided_slice %270 {offsets = [0, 0], sizes = [8, 64], strides = [1, 1]} : vector<8x192xf32> to vector<8x64xf32>
    %272 = vector.extract_strided_slice %270 {offsets = [0, 64], sizes = [8, 64], strides = [1, 1]} : vector<8x192xf32> to vector<8x64xf32>
    %273 = vector.extract_strided_slice %270 {offsets = [0, 128], sizes = [8, 64], strides = [1, 1]} : vector<8x192xf32> to vector<8x64xf32>
    %274 = arith.mulf %272, %251 : vector<8x64xf32>
    %275 = arith.mulf %271, %264 : vector<8x64xf32>
    %276 = arith.addf %274, %275 : vector<8x64xf32>
    %277 = math.tanh %276 : vector<8x64xf32>
    %278 = arith.mulf %273, %277 : vector<8x64xf32>
    %279 = vector.broadcast %c7_i32 : i32 to vector<8x64xi32>
    %280 = vector.broadcast %252 : i32 to vector<8x64xi32>
    %281 = arith.select %16, %279, %280 : vector<8x64xi1>, vector<8x64xi32>
    %282 = arith.cmpi slt, %281, %13 : vector<8x64xi32>
    %283 = arith.select %282, %278, %250 : vector<8x64xi1>, vector<8x64xf32>
    %284 = arith.select %282, %276, %251 : vector<8x64xi1>, vector<8x64xf32>
    %c8_i32 = arith.constant 8 : i32
    %c9_i32_70 = arith.constant 9 : i32
    %285 = arith.subi %c9_i32_70, %c8_i32 : i32
    %286 = arith.index_cast %c8_i32 : i32 to index
    %c0_71 = arith.constant 0 : index
    %c0_72 = arith.constant 0 : index
    %287 = vector.load %arg6[%286, %c0_71, %c0_72] : memref<10x8x256xf32, #tpu.memory_space<vmem>>, vector<1x8x256xf32>
    %288 = vector.shape_cast %287 : vector<1x8x256xf32> to vector<8x256xf32>
    %289 = arith.index_cast %285 : i32 to index
    %c0_73 = arith.constant 0 : index
    %c0_74 = arith.constant 0 : index
    %290 = vector.load %arg6[%289, %c0_73, %c0_74] : memref<10x8x256xf32, #tpu.memory_space<vmem>>, vector<1x8x256xf32>
    %291 = vector.shape_cast %290 : vector<1x8x256xf32> to vector<8x256xf32>
    %292 = arith.select %19, %288, %291 : vector<8x256xi1>, vector<8x256xf32>
    %293 = arith.truncf %283 : vector<8x64xf32> to vector<8x64xbf16>
    %cst_75 = arith.constant dense<0.000000e+00> : vector<8x256xf32>
    %294 = tpu.matmul %293, %10, %cst_75 {dimension_numbers = #tpu.dot_dimension_numbers<[1], [0], [0], [1], [0, 0, 1, 1], [], []>} : vector<8x64xbf16>, vector<64x256xbf16>, vector<8x256xf32> -> vector<8x256xf32>
    %295 = arith.addf %292, %294 : vector<8x256xf32>
    %296 = vector.extract_strided_slice %295 {offsets = [0, 0], sizes = [8, 64], strides = [1, 1]} : vector<8x256xf32> to vector<8x64xf32>
    %297 = math.tanh %296 : vector<8x64xf32>
    %298 = vector.extract_strided_slice %295 {offsets = [0, 64], sizes = [8, 192], strides = [1, 1]} : vector<8x256xf32> to vector<8x192xf32>
    %299 = arith.negf %298 : vector<8x192xf32>
    %300 = math.exp %299 : vector<8x192xf32>
    %cst_76 = arith.constant 1.000000e+00 : f32
    %301 = vector.broadcast %cst_76 : f32 to vector<8x192xf32>
    %302 = arith.addf %301, %300 : vector<8x192xf32>
    %303 = arith.divf %301, %302 : vector<8x192xf32>
    %304 = vector.extract_strided_slice %303 {offsets = [0, 0], sizes = [8, 64], strides = [1, 1]} : vector<8x192xf32> to vector<8x64xf32>
    %305 = vector.extract_strided_slice %303 {offsets = [0, 64], sizes = [8, 64], strides = [1, 1]} : vector<8x192xf32> to vector<8x64xf32>
    %306 = vector.extract_strided_slice %303 {offsets = [0, 128], sizes = [8, 64], strides = [1, 1]} : vector<8x192xf32> to vector<8x64xf32>
    %307 = arith.mulf %305, %284 : vector<8x64xf32>
    %308 = arith.mulf %304, %297 : vector<8x64xf32>
    %309 = arith.addf %307, %308 : vector<8x64xf32>
    %310 = math.tanh %309 : vector<8x64xf32>
    %311 = arith.mulf %306, %310 : vector<8x64xf32>
    %312 = vector.broadcast %c8_i32 : i32 to vector<8x64xi32>
    %313 = vector.broadcast %285 : i32 to vector<8x64xi32>
    %314 = arith.select %16, %312, %313 : vector<8x64xi1>, vector<8x64xi32>
    %315 = arith.cmpi slt, %314, %13 : vector<8x64xi32>
    %316 = arith.select %315, %311, %283 : vector<8x64xi1>, vector<8x64xf32>
    %317 = arith.select %315, %309, %284 : vector<8x64xi1>, vector<8x64xf32>
    %c9_i32_77 = arith.constant 9 : i32
    %c9_i32_78 = arith.constant 9 : i32
    %318 = arith.subi %c9_i32_78, %c9_i32_77 : i32
    %319 = arith.index_cast %c9_i32_77 : i32 to index
    %c0_79 = arith.constant 0 : index
    %c0_80 = arith.constant 0 : index
    %320 = vector.load %arg6[%319, %c0_79, %c0_80] : memref<10x8x256xf32, #tpu.memory_space<vmem>>, vector<1x8x256xf32>
    %321 = vector.shape_cast %320 : vector<1x8x256xf32> to vector<8x256xf32>
    %322 = arith.index_cast %318 : i32 to index
    %c0_81 = arith.constant 0 : index
    %c0_82 = arith.constant 0 : index
    %323 = vector.load %arg6[%322, %c0_81, %c0_82] : memref<10x8x256xf32, #tpu.memory_space<vmem>>, vector<1x8x256xf32>
    %324 = vector.shape_cast %323 : vector<1x8x256xf32> to vector<8x256xf32>
    %325 = arith.select %19, %321, %324 : vector<8x256xi1>, vector<8x256xf32>
    %326 = arith.truncf %316 : vector<8x64xf32> to vector<8x64xbf16>
    %cst_83 = arith.constant dense<0.000000e+00> : vector<8x256xf32>
    %327 = tpu.matmul %326, %10, %cst_83 {dimension_numbers = #tpu.dot_dimension_numbers<[1], [0], [0], [1], [0, 0, 1, 1], [], []>} : vector<8x64xbf16>, vector<64x256xbf16>, vector<8x256xf32> -> vector<8x256xf32>
    %328 = arith.addf %325, %327 : vector<8x256xf32>
    %329 = vector.extract_strided_slice %328 {offsets = [0, 0], sizes = [8, 64], strides = [1, 1]} : vector<8x256xf32> to vector<8x64xf32>
    %330 = math.tanh %329 : vector<8x64xf32>
    %331 = vector.extract_strided_slice %328 {offsets = [0, 64], sizes = [8, 192], strides = [1, 1]} : vector<8x256xf32> to vector<8x192xf32>
    %332 = arith.negf %331 : vector<8x192xf32>
    %333 = math.exp %332 : vector<8x192xf32>
    %cst_84 = arith.constant 1.000000e+00 : f32
    %334 = vector.broadcast %cst_84 : f32 to vector<8x192xf32>
    %335 = arith.addf %334, %333 : vector<8x192xf32>
    %336 = arith.divf %334, %335 : vector<8x192xf32>
    %337 = vector.extract_strided_slice %336 {offsets = [0, 0], sizes = [8, 64], strides = [1, 1]} : vector<8x192xf32> to vector<8x64xf32>
    %338 = vector.extract_strided_slice %336 {offsets = [0, 64], sizes = [8, 64], strides = [1, 1]} : vector<8x192xf32> to vector<8x64xf32>
    %339 = vector.extract_strided_slice %336 {offsets = [0, 128], sizes = [8, 64], strides = [1, 1]} : vector<8x192xf32> to vector<8x64xf32>
    %340 = arith.mulf %338, %317 : vector<8x64xf32>
    %341 = arith.mulf %337, %330 : vector<8x64xf32>
    %342 = arith.addf %340, %341 : vector<8x64xf32>
    %343 = math.tanh %342 : vector<8x64xf32>
    %344 = arith.mulf %339, %343 : vector<8x64xf32>
    %345 = vector.broadcast %c9_i32_77 : i32 to vector<8x64xi32>
    %346 = vector.broadcast %318 : i32 to vector<8x64xi32>
    %347 = arith.select %16, %345, %346 : vector<8x64xi1>, vector<8x64xi32>
    %348 = arith.cmpi slt, %347, %13 : vector<8x64xi32>
    %349 = arith.select %348, %344, %316 : vector<8x64xi1>, vector<8x64xf32>
    %350 = arith.select %348, %342, %317 : vector<8x64xi1>, vector<8x64xf32>
    %c10_i32 = arith.constant 10 : i32
    %c0_85 = arith.constant 0 : index
    %c0_86 = arith.constant 0 : index
    %351 = vector.load %arg5[%c0_85, %c0_86] : memref<8x64xf32, #tpu.memory_space<vmem>>, vector<8x64xf32>
    tpu.vector_store %arg5[%c0_85, %c0_86], %349 {strides = array<i32>} : memref<8x64xf32, #tpu.memory_space<vmem>>, vector<8x64xf32>,
    return
  }
}

</mosaic_0001>

<llo_original>
// kernel: vanilla_bilstm_forward.1
$region0: #{vanilla_bilstm_forward.1}
  #allocation0 [shape = 'u32[]', space=smem, size = 0x4, offset = 0x4, fixed_abs, tag = 'smem constant byte address 0x4 - core index']
  #allocation1 [shape = 'u32[144,128]{1,0:T(1,128)}', space=vmem, size = 0x12000, scoped, tag = 'internal scratch']
  #allocation2 [shape = 'f32[10,8,256]{2,1,0:T(8,128)}', space=vmem, size = 0x14000, scoped, tag = 'scratch operand']
  %s0 = inlined_call_operand.vmem [shape: f32[10,8,32], index: 0, kind: input, shape index: {}]
  %s1 = inlined_call_operand.vmem [shape: s32[8,1], index: 1, kind: input, shape index: {}]
  %s2 = inlined_call_operand.vmem [shape: f32[32,256], index: 2, kind: input, shape index: {}]
  %s3 = inlined_call_operand.vmem [shape: bf16[64,256], index: 3, kind: input, shape index: {}]
  %s4 = inlined_call_operand.vmem [shape: f32[1,256], index: 4, kind: input, shape index: {}]
  %s5 = inlined_call_operand.vmem [shape: f32[8,64], index: 5, kind: output, shape index: {}]
  %s6 = sld [smem:[#allocation0]]
  $region30: #{vanilla_bilstm_forward.1} parent=0
    _
  %s8 = ssub.s32 1, %s6
  %s9 = scalar_select 0, %s8, %s6
  // Predicated region
  $region2: #{vanilla_bilstm_forward.1} parent=0 // pred_check
    _
  $region3: #{vanilla_bilstm_forward.1} parent=0 // pred_check_branch
    %11 = sbr.rel (0) target = $region5
  $region4: #{vanilla_bilstm_forward.1} parent=0 // pred_region
    _
  $region5: #{vanilla_bilstm_forward.1} parent=0 // pred_fallthru
    _
  // Predicated region
  $region6: #{vanilla_bilstm_forward.1} parent=0 // pred_check
    _
  $region7: #{vanilla_bilstm_forward.1} parent=0 // pred_check_branch
    %13 = sbr.rel (0) target = $region9
  $region8: #{vanilla_bilstm_forward.1} parent=0 // pred_region
    _
  $region9: #{vanilla_bilstm_forward.1} parent=0 // pred_fallthru
    _
  // Predicated region
  $region10: #{vanilla_bilstm_forward.1} parent=0 // pred_check
    _
  $region11: #{vanilla_bilstm_forward.1} parent=0 // pred_check_branch
    %15 = sbr.rel (0) target = $region13
  $region12: #{vanilla_bilstm_forward.1} parent=0 // pred_region
    _
  $region13: #{vanilla_bilstm_forward.1} parent=0 // pred_fallthru
    _
  // Predicated region
  $region14: #{vanilla_bilstm_forward.1} parent=0 // pred_check
    _
  $region15: #{vanilla_bilstm_forward.1} parent=0 // pred_check_branch
    %17 = sbr.rel (0) target = $region17
  $region16: #{vanilla_bilstm_forward.1} parent=0 // pred_region
    _
  $region17: #{vanilla_bilstm_forward.1} parent=0 // pred_fallthru
    _
  // Predicated region
  $region18: #{vanilla_bilstm_forward.1} parent=0 // pred_check
    _
  $region19: #{vanilla_bilstm_forward.1} parent=0 // pred_check_branch
    %19 = sbr.rel (0) target = $region21
  $region20: #{vanilla_bilstm_forward.1} parent=0 // pred_region
    _
  $region21: #{vanilla_bilstm_forward.1} parent=0 // pred_fallthru
    _
  %v21 = vld [vmem:[%s0] sm:$0xff]
  %v22 = vld [vmem:[%s0 + $0x8] sm:$0xff]
  %v23 = vld [vmem:[%s0 + $0x10] sm:$0xff]
  %v24 = vld [vmem:[%s0 + $0x18] sm:$0xff]
  %v25 = vld [vmem:[%s0 + $0x20] sm:$0xff]
  %v26 = vld [vmem:[%s0 + $0x28] sm:$0xff]
  %v27 = vld [vmem:[%s0 + $0x30] sm:$0xff]
  %v28 = vld [vmem:[%s0 + $0x38] sm:$0xff]
  %v29 = vld [vmem:[%s0 + $0x40] sm:$0xff]
  %v30 = vld [vmem:[%s0 + $0x48] sm:$0xff]
  %v31 = vld [vmem:[%s2] sm:$0xff]
  %v32 = vld [vmem:[%s2 + $0x8] sm:$0xff]
  %v33 = vld [vmem:[%s2 + $0x10] sm:$0xff]
  %v34 = vld [vmem:[%s2 + $0x18] sm:$0xff]
  %v35 = vld [vmem:[%s2 + $0x20] sm:$0xff]
  %v36 = vld [vmem:[%s2 + $0x28] sm:$0xff]
  %v37 = vld [vmem:[%s2 + $0x30] sm:$0xff]
  %v38 = vld [vmem:[%s2 + $0x38] sm:$0xff]
  %v39 = vld [vmem:[%s4] sm:$0x3]
  %v41 = vlaneseq
  %v42 = vshrl.u32 %v41, 7
  %v43 = vsub.s32 0, %v42
  %v44 = vrot.slane %v39, %v43
  %v45 = vlaneseq
  %v46 = vshrl.u32 %v45, 7
  %v47 = vsub.s32 1, %v46
  %v48 = vrot.slane %v39, %v47
  %vm51 = vcmask 261120
  %v53 = vsel %vm51, %v21, 0
  %v56 = vsel %vm51, %v22, 0
  %v59 = vsel %vm51, %v23, 0
  %v62 = vsel %vm51, %v24, 0
  %v65 = vsel %vm51, %v25, 0
  %v68 = vsel %vm51, %v26, 0
  %v71 = vsel %vm51, %v27, 0
  %v74 = vsel %vm51, %v28, 0
  %v77 = vsel %vm51, %v29, 0
  %v80 = vsel %vm51, %v30, 0
  %82 = vmatprep.subr.mxu0 0.0
  %83 = vmatpush1.msra.mxu0 0.0
  %84 = vmatprep.subr.mxu0 0.0
  %85 = vmatpush1.msra.mxu0 0.0
  %86 = vmatprep.subr.mxu0 0.0
  %87 = vmatpush1.msra.mxu0 0.0
  %88 = vmatprep.subr.mxu0 0.0
  %89 = vmatpush1.msra.mxu0 0.0
  %90 = vmatprep.subr.mxu0 0.0
  %91 = vmatpush1.msra.mxu0 0.0
  %92 = vmatprep.subr.mxu0 0.0
  %93 = vmatpush1.msra.mxu0 0.0
  %94 = vmatprep.subr.mxu0 0.0
  %95 = vmatpush1.msra.mxu0 0.0
  %96 = vmatprep.subr.mxu0 0.0
  %97 = vmatpush1.msra.mxu0 0.0
  %98 = vmatprep.subr.mxu0 0.0
  %99 = vmatpush1.msra.mxu0 0.0
  %100 = vmatprep.subr.mxu0 0.0
  %101 = vmatpush1.msra.mxu0 0.0
  %102 = vmatprep.subr.mxu0 0.0
  %103 = vmatpush1.msra.mxu0 0.0
  %104 = vmatprep.subr.mxu0 0.0
  %105 = vmatpush1.msra.mxu0 0.0
  %106 = vmatprep.subr.mxu0 %v38
  %107 = vmatpush1.msra.mxu0 %v37
  %108 = vmatprep.subr.mxu0 %v36
  %109 = vmatpush1.msra.mxu0 %v35
  %110 = vmatprep.subr.mxu0 %v34
  %111 = vmatpush1.msra.mxu0 %v33
  %112 = vmatprep.subr.mxu0 %v32
  %113 = vmatpush1.msra.mxu0 %v31
  %114 = vmatprep.subr.mxu0 0.0
  %115 = vmatpush2.msra.mxu0 0.0
  %116 = vmatprep.subr.mxu0 0.0
  %117 = vmatpush2.msra.mxu0 0.0
  %118 = vmatprep.subr.mxu0 0.0
  %119 = vmatpush2.msra.mxu0 0.0
  %120 = vmatprep.subr.mxu0 0.0
  %121 = vmatpush2.msra.mxu0 0.0
  %122 = vmatprep.subr.mxu0 0.0
  %123 = vmatpush2.msra.mxu0 0.0
  %124 = vmatprep.subr.mxu0 0.0
  %125 = vmatpush2.msra.mxu0 0.0
  %126 = vmatprep.subr.mxu0 0.0
  %127 = vmatpush2.msra.mxu0 0.0
  %128 = vmatprep.subr.mxu0 0.0
  %129 = vmatpush2.msra.mxu0 0.0
  %130 = vmatprep.subr.mxu0 0.0
  %131 = vmatpush2.msra.mxu0 0.0
  %132 = vmatprep.subr.mxu0 0.0
  %133 = vmatpush2.msra.mxu0 0.0
  %134 = vmatprep.subr.mxu0 0.0
  %135 = vmatpush2.msra.mxu0 0.0
  %136 = vmatprep.subr.mxu0 0.0
  %137 = vmatpush2.msra.mxu0 0.0
  %138 = vmatprep.subr.mxu0 0.0
  %139 = vmatpush2.msra.mxu0 0.0
  %140 = vmatprep.subr.mxu0 0.0
  %141 = vmatpush2.msra.mxu0 0.0
  %142 = vmatprep.subr.mxu0 0.0
  %143 = vmatpush2.msra.mxu0 0.0
  %144 = vmatprep.subr.mxu0 0.0
  %145 = vmatpush2.msra.mxu0 0.0
  %146 = vmatprep.mubr.f32.mxu0 0.0
  %147 = vmatmul.mubr.f32.gmra.mxu0 %v53
  %v148 = vpop.f32.mrf.mxu0
  %v149 = vadd.f32 %v44, %v148
  %v150 = vpop.f32.mrf.mxu0
  %v151 = vadd.f32 %v48, %v150
  %152 = vmatprep.mubr.f32.mxu0 0.0
  %153 = vmatmul.mubr.f32.gmra.mxu0 %v56
  %v154 = vpop.f32.mrf.mxu0
  %v155 = vadd.f32 %v44, %v154
  %v156 = vpop.f32.mrf.mxu0
  %v157 = vadd.f32 %v48, %v156
  %158 = vmatprep.mubr.f32.mxu0 0.0
  %159 = vmatmul.mubr.f32.gmra.mxu0 %v59
  %v160 = vpop.f32.mrf.mxu0
  %v161 = vadd.f32 %v44, %v160
  %v162 = vpop.f32.mrf.mxu0
  %v163 = vadd.f32 %v48, %v162
  %164 = vmatprep.mubr.f32.mxu0 0.0
  %165 = vmatmul.mubr.f32.gmra.mxu0 %v62
  %v166 = vpop.f32.mrf.mxu0
  %v167 = vadd.f32 %v44, %v166
  %v168 = vpop.f32.mrf.mxu0
  %v169 = vadd.f32 %v48, %v168
  %170 = vmatprep.mubr.f32.mxu0 0.0
  %171 = vmatmul.mubr.f32.gmra.mxu0 %v65
  %v172 = vpop.f32.mrf.mxu0
  %v173 = vadd.f32 %v44, %v172
  %v174 = vpop.f32.mrf.mxu0
  %v175 = vadd.f32 %v48, %v174
  %176 = vmatprep.mubr.f32.mxu0 0.0
  %177 = vmatmul.mubr.f32.gmra.mxu0 %v68
  %v178 = vpop.f32.mrf.mxu0
  %v179 = vadd.f32 %v44, %v178
  %v180 = vpop.f32.mrf.mxu0
  %v181 = vadd.f32 %v48, %v180
  %182 = vmatprep.mubr.f32.mxu0 0.0
  %183 = vmatmul.mubr.f32.gmra.mxu0 %v71
  %v184 = vpop.f32.mrf.mxu0
  %v185 = vadd.f32 %v44, %v184
  %v186 = vpop.f32.mrf.mxu0
  %v187 = vadd.f32 %v48, %v186
  %188 = vmatprep.mubr.f32.mxu0 0.0
  %189 = vmatmul.mubr.f32.gmra.mxu0 %v74
  %v190 = vpop.f32.mrf.mxu0
  %v191 = vadd.f32 %v44, %v190
  %v192 = vpop.f32.mrf.mxu0
  %v193 = vadd.f32 %v48, %v192
  %194 = vmatprep.mubr.f32.mxu0 0.0
  %195 = vmatmul.mubr.f32.gmra.mxu0 %v77
  %v196 = vpop.f32.mrf.mxu0
  %v197 = vadd.f32 %v44, %v196
  %v198 = vpop.f32.mrf.mxu0
  %v199 = vadd.f32 %v48, %v198
  %200 = vmatprep.mubr.f32.mxu0 0.0
  %201 = vmatmul.mubr.f32.gmra.mxu0 %v80
  %v202 = vpop.f32.mrf.mxu0
  %v203 = vadd.f32 %v44, %v202
  %v204 = vpop.f32.mrf.mxu0
  %v205 = vadd.f32 %v48, %v204
  %206 = vdwg.mxu0
  %207 = vst [vmem:[#allocation2] sm:$0xff] %v149
  %208 = vst [vmem:[#allocation2 + $0x8] sm:$0xff] %v151
  %209 = vst [vmem:[#allocation2 + $0x10] sm:$0xff] %v155
  %210 = vst [vmem:[#allocation2 + $0x18] sm:$0xff] %v157
  %211 = vst [vmem:[#allocation2 + $0x20] sm:$0xff] %v161
  %212 = vst [vmem:[#allocation2 + $0x28] sm:$0xff] %v163
  %213 = vst [vmem:[#allocation2 + $0x30] sm:$0xff] %v167
  %214 = vst [vmem:[#allocation2 + $0x38] sm:$0xff] %v169
  %215 = vst [vmem:[#allocation2 + $0x40] sm:$0xff] %v173
  %216 = vst [vmem:[#allocation2 + $0x48] sm:$0xff] %v175
  %217 = vst [vmem:[#allocation2 + $0x50] sm:$0xff] %v179
  %218 = vst [vmem:[#allocation2 + $0x58] sm:$0xff] %v181
  %219 = vst [vmem:[#allocation2 + $0x60] sm:$0xff] %v185
  %220 = vst [vmem:[#allocation2 + $0x68] sm:$0xff] %v187
  %221 = vst [vmem:[#allocation2 + $0x70] sm:$0xff] %v191
  %222 = vst [vmem:[#allocation2 + $0x78] sm:$0xff] %v193
  %223 = vst [vmem:[#allocation2 + $0x80] sm:$0xff] %v197
  %224 = vst [vmem:[#allocation2 + $0x88] sm:$0xff] %v199
  %225 = vst [vmem:[#allocation2 + $0x90] sm:$0xff] %v203
  %226 = vst [vmem:[#allocation2 + $0x98] sm:$0xff] %v205
  %v227 = vld [vmem:[%s3] sm:$0xff]
  %v228 = vld [vmem:[%s3 + $0x8] sm:$0xff]
  %v229 = vld [vmem:[%s3 + $0x10] sm:$0xff]
  %v230 = vld [vmem:[%s3 + $0x18] sm:$0xff]
  %v231 = vld [vmem:[%s3 + $0x20] sm:$0xff]
  %v232 = vld [vmem:[%s3 + $0x28] sm:$0xff]
  %v233 = vld [vmem:[%s3 + $0x30] sm:$0xff]
  %v234 = vld [vmem:[%s3 + $0x38] sm:$0xff]
  %v235 = vld [vmem:[%s1] sm:$0xff]
  %236 = vset.pattern.permute.xlu0 0
  %237 = vperm.xlu0 %236, %v235
  %v238 = vpop.permute.xlu0 %237
  %v239 = vlaneseq
  %v240 = vand.u32 %v239, 127
  %vm241 = vcmp.lt.s32.totalorder %v240, 32
  %242 = vrot.lane.b32.xlu0 %v240, 64
  %v243 = vpop.permute.xlu0 %242
  %vm244 = vcmask 523264
  %v245 = vsel %vm244, %v240, %v243
  %vm246 = vcmp.lt.s32.totalorder %v245, 32
  %v247 = vld [vmem:[#allocation2] sm:$0xff]
  %v248 = vld [vmem:[#allocation2 + $0x8] sm:$0xff]
  %s249 = scalar_lea.vmem [#allocation2], 144
  %v250 = vld [vmem:[%s249] sm:$0xff]
  %v251 = vld [vmem:[%s249 + $0x8] sm:$0xff]
  %v252 = vsel %vm246, %v247, %v250
  %v253 = vsel %vm246, %v248, %v251
  %v262 = vunpack.c.l.b16 %v227
  %v263 = vunpack.c.h.b16 %v227
  %v264 = vunpack.c.l.b16 %v228
  %v265 = vunpack.c.h.b16 %v228
  %v266 = vunpack.c.l.b16 %v229
  %v267 = vunpack.c.h.b16 %v229
  %v268 = vunpack.c.l.b16 %v230
  %v269 = vunpack.c.h.b16 %v230
  %v270 = vunpack.c.l.b16 %v231
  %v271 = vunpack.c.h.b16 %v231
  %v272 = vunpack.c.l.b16 %v232
  %v273 = vunpack.c.h.b16 %v232
  %v274 = vunpack.c.l.b16 %v233
  %v275 = vunpack.c.h.b16 %v233
  %v276 = vunpack.c.l.b16 %v234
  %v277 = vunpack.c.h.b16 %v234
  %v278 = vpack.c.b16 %v264, %v262
  %v279 = vpack.c.b16 %v265, %v263
  %v280 = vpack.c.b16 %v268, %v266
  %v281 = vpack.c.b16 %v269, %v267
  %v282 = vpack.c.b16 %v272, %v270
  %v283 = vpack.c.b16 %v273, %v271
  %v284 = vpack.c.b16 %v276, %v274
  %v285 = vpack.c.b16 %v277, %v275
  %v295 = vsel %vm244, 0, 0
  %297 = vmatprep.subr.bf16.mxu0 0
  %298 = vmatpush1.bf16.msra.mxu0 0
  %299 = vmatprep.subr.bf16.mxu0 0
  %300 = vmatpush1.bf16.msra.mxu0 0
  %301 = vmatprep.subr.bf16.mxu0 0
  %302 = vmatpush1.bf16.msra.mxu0 0
  %303 = vmatprep.subr.bf16.mxu0 0
  %304 = vmatpush1.bf16.msra.mxu0 0
  %305 = vmatprep.subr.bf16.mxu0 %v285
  %306 = vmatpush1.bf16.msra.mxu0 %v284
  %307 = vmatprep.subr.bf16.mxu0 %v283
  %308 = vmatpush1.bf16.msra.mxu0 %v282
  %309 = vmatprep.subr.bf16.mxu0 %v281
  %310 = vmatpush1.bf16.msra.mxu0 %v280
  %311 = vmatprep.subr.bf16.mxu0 %v279
  %312 = vmatpush1.bf16.msra.mxu0 %v278
  %313 = vmatprep.subr.bf16.mxu0 0
  %314 = vmatpush2.bf16.msra.mxu0 0
  %315 = vmatprep.subr.bf16.mxu0 0
  %316 = vmatpush2.bf16.msra.mxu0 0
  %317 = vmatprep.subr.bf16.mxu0 0
  %318 = vmatpush2.bf16.msra.mxu0 0
  %319 = vmatprep.subr.bf16.mxu0 0
  %320 = vmatpush2.bf16.msra.mxu0 0
  %321 = vmatprep.subr.bf16.mxu0 0
  %322 = vmatpush2.bf16.msra.mxu0 0
  %323 = vmatprep.subr.bf16.mxu0 0
  %324 = vmatpush2.bf16.msra.mxu0 0
  %325 = vmatprep.subr.bf16.mxu0 0
  %326 = vmatpush2.bf16.msra.mxu0 0
  %327 = vmatprep.subr.bf16.mxu0 0
  %328 = vmatpush2.bf16.msra.mxu0 0
  %329 = vmatprep.mubr.bf16.mxu0 0
  %330 = vmatmul.mubr.bf16.gmra.mxu0 %v295
  %v331 = vpop.f32.mrf.mxu0
  %v332 = vadd.f32 0.0, %v331
  %v333 = vpop.f32.mrf.mxu0
  %v334 = vadd.f32 0.0, %v333
  %v335 = vpop.f32.mrf.mxu0
  %v336 = vpop.f32.mrf.mxu0
  %337 = vdwg.mxu0
  %v338 = vadd.f32 %v252, %v332
  %v339 = vadd.f32 %v253, %v334
  %v340 = vtanh.pop %v338
  %v341 = vxor.u32 %v338, 2147483648
  %v342 = vxor.u32 %v339, 2147483648
  %v343 = vmul.f32 %v341, 1.442695
  %v344 = vpow.pop %v343
  %v345 = vmul.f32 %v342, 1.442695
  %v346 = vpow.pop %v345
  %v347 = vadd.f32 %v344, 1.0
  %v348 = vadd.f32 %v346, 1.0
  %v349 = vrcp.pop %v347
  %v350 = vmul.f32 1.0, %v349
  %v351 = vrcp.pop %v348
  %v352 = vmul.f32 1.0, %v351
  %v353 = vmul.f32 %v352, 0.0
  %355 = vrot.lane.b32.xlu0 %v340, 64
  %v356 = vpop.permute.xlu0 %355
  %v358 = vmul.f32 %v350, %v356
  %360 = vrot.lane.b32.xlu0 %v358, 64
  %v361 = vpop.permute.xlu0 %360
  %v363 = vadd.f32 %v353, %v361
  %v364 = vtanh.pop %v363
  %366 = vrot.lane.b32.xlu0 %v364, 64
  %v367 = vpop.permute.xlu0 %366
  %v369 = vmul.f32 %v352, %v367
  %v370 = vsel %vm241, 0, 9
  %vm371 = vcmp.lt.s32.totalorder %v370, %v238
  %373 = vrot.lane.b32.xlu0 %v369, 64
  %v374 = vpop.permute.xlu0 %373
  %v376 = vsel %vm371, %v374, 0.0
  %v377 = vsel %vm371, %v363, 0.0
  %s378 = scalar_lea.vmem [#allocation2], 16
  %v379 = vld [vmem:[%s378] sm:$0xff]
  %v380 = vld [vmem:[%s378 + $0x8] sm:$0xff]
  %s381 = scalar_lea.vmem [#allocation2], 128
  %v382 = vld [vmem:[%s381] sm:$0xff]
  %v383 = vld [vmem:[%s381 + $0x8] sm:$0xff]
  %v384 = vsel %vm246, %v379, %v382
  %v385 = vsel %vm246, %v380, %v383
  %v386 = vpack.c.bf16 %v376, %v376
  %v388 = vsel %vm244, %v386, 0
  %390 = vmatprep.subr.bf16.mxu0 0
  %391 = vmatpush1.bf16.msra.mxu0 0
  %392 = vmatprep.subr.bf16.mxu0 0
  %393 = vmatpush1.bf16.msra.mxu0 0
  %394 = vmatprep.subr.bf16.mxu0 0
  %395 = vmatpush1.bf16.msra.mxu0 0
  %396 = vmatprep.subr.bf16.mxu0 0
  %397 = vmatpush1.bf16.msra.mxu0 0
  %398 = vmatprep.subr.bf16.mxu0 %v285
  %399 = vmatpush1.bf16.msra.mxu0 %v284
  %400 = vmatprep.subr.bf16.mxu0 %v283
  %401 = vmatpush1.bf16.msra.mxu0 %v282
  %402 = vmatprep.subr.bf16.mxu0 %v281
  %403 = vmatpush1.bf16.msra.mxu0 %v280
  %404 = vmatprep.subr.bf16.mxu0 %v279
  %405 = vmatpush1.bf16.msra.mxu0 %v278
  %406 = vmatprep.subr.bf16.mxu0 0
  %407 = vmatpush2.bf16.msra.mxu0 0
  %408 = vmatprep.subr.bf16.mxu0 0
  %409 = vmatpush2.bf16.msra.mxu0 0
  %410 = vmatprep.subr.bf16.mxu0 0
  %411 = vmatpush2.bf16.msra.mxu0 0
  %412 = vmatprep.subr.bf16.mxu0 0
  %413 = vmatpush2.bf16.msra.mxu0 0
  %414 = vmatprep.subr.bf16.mxu0 0
  %415 = vmatpush2.bf16.msra.mxu0 0
  %416 = vmatprep.subr.bf16.mxu0 0
  %417 = vmatpush2.bf16.msra.mxu0 0
  %418 = vmatprep.subr.bf16.mxu0 0
  %419 = vmatpush2.bf16.msra.mxu0 0
  %420 = vmatprep.subr.bf16.mxu0 0
  %421 = vmatpush2.bf16.msra.mxu0 0
  %422 = vmatprep.mubr.bf16.mxu0 0
  %423 = vmatmul.mubr.bf16.gmra.mxu0 %v388
  %v424 = vpop.f32.mrf.mxu0
  %v425 = vadd.f32 0.0, %v424
  %v426 = vpop.f32.mrf.mxu0
  %v427 = vadd.f32 0.0, %v426
  %v428 = vpop.f32.mrf.mxu0
  %v429 = vpop.f32.mrf.mxu0
  %430 = vdwg.mxu0
  %v431 = vadd.f32 %v384, %v425
  %v432 = vadd.f32 %v385, %v427
  %v433 = vtanh.pop %v431
  %v434 = vxor.u32 %v431, 2147483648
  %v435 = vxor.u32 %v432, 2147483648
  %v436 = vmul.f32 %v434, 1.442695
  %v437 = vpow.pop %v436
  %v438 = vmul.f32 %v435, 1.442695
  %v439 = vpow.pop %v438
  %v440 = vadd.f32 %v437, 1.0
  %v441 = vadd.f32 %v439, 1.0
  %v442 = vrcp.pop %v440
  %v443 = vmul.f32 1.0, %v442
  %v444 = vrcp.pop %v441
  %v445 = vmul.f32 1.0, %v444
  %v446 = vmul.f32 %v445, %v377
  %448 = vrot.lane.b32.xlu0 %v433, 64
  %v449 = vpop.permute.xlu0 %448
  %v451 = vmul.f32 %v443, %v449
  %453 = vrot.lane.b32.xlu0 %v451, 64
  %v454 = vpop.permute.xlu0 %453
  %v456 = vadd.f32 %v446, %v454
  %v457 = vtanh.pop %v456
  %459 = vrot.lane.b32.xlu0 %v457, 64
  %v460 = vpop.permute.xlu0 %459
  %v462 = vmul.f32 %v445, %v460
  %v463 = vsel %vm241, 1, 8
  %vm464 = vcmp.lt.s32.totalorder %v463, %v238
  %466 = vrot.lane.b32.xlu0 %v462, 64
  %v467 = vpop.permute.xlu0 %466
  %v469 = vsel %vm464, %v467, %v376
  %v470 = vsel %vm464, %v456, %v377
  %s471 = scalar_lea.vmem [#allocation2], 32
  %v472 = vld [vmem:[%s471] sm:$0xff]
  %v473 = vld [vmem:[%s471 + $0x8] sm:$0xff]
  %s474 = scalar_lea.vmem [#allocation2], 112
  %v475 = vld [vmem:[%s474] sm:$0xff]
  %v476 = vld [vmem:[%s474 + $0x8] sm:$0xff]
  %v477 = vsel %vm246, %v472, %v475
  %v478 = vsel %vm246, %v473, %v476
  %v479 = vpack.c.bf16 %v469, %v469
  %v481 = vsel %vm244, %v479, 0
  %483 = vmatprep.subr.bf16.mxu0 0
  %484 = vmatpush1.bf16.msra.mxu0 0
  %485 = vmatprep.subr.bf16.mxu0 0
  %486 = vmatpush1.bf16.msra.mxu0 0
  %487 = vmatprep.subr.bf16.mxu0 0
  %488 = vmatpush1.bf16.msra.mxu0 0
  %489 = vmatprep.subr.bf16.mxu0 0
  %490 = vmatpush1.bf16.msra.mxu0 0
  %491 = vmatprep.subr.bf16.mxu0 %v285
  %492 = vmatpush1.bf16.msra.mxu0 %v284
  %493 = vmatprep.subr.bf16.mxu0 %v283
  %494 = vmatpush1.bf16.msra.mxu0 %v282
  %495 = vmatprep.subr.bf16.mxu0 %v281
  %496 = vmatpush1.bf16.msra.mxu0 %v280
  %497 = vmatprep.subr.bf16.mxu0 %v279
  %498 = vmatpush1.bf16.msra.mxu0 %v278
  %499 = vmatprep.subr.bf16.mxu0 0
  %500 = vmatpush2.bf16.msra.mxu0 0
  %501 = vmatprep.subr.bf16.mxu0 0
  %502 = vmatpush2.bf16.msra.mxu0 0
  %503 = vmatprep.subr.bf16.mxu0 0
  %504 = vmatpush2.bf16.msra.mxu0 0
  %505 = vmatprep.subr.bf16.mxu0 0
  %506 = vmatpush2.bf16.msra.mxu0 0
  %507 = vmatprep.subr.bf16.mxu0 0
  %508 = vmatpush2.bf16.msra.mxu0 0
  %509 = vmatprep.subr.bf16.mxu0 0
  %510 = vmatpush2.bf16.msra.mxu0 0
  %511 = vmatprep.subr.bf16.mxu0 0
  %512 = vmatpush2.bf16.msra.mxu0 0
  %513 = vmatprep.subr.bf16.mxu0 0
  %514 = vmatpush2.bf16.msra.mxu0 0
  %515 = vmatprep.mubr.bf16.mxu0 0
  %516 = vmatmul.mubr.bf16.gmra.mxu0 %v481
  %v517 = vpop.f32.mrf.mxu0
  %v518 = vadd.f32 0.0, %v517
  %v519 = vpop.f32.mrf.mxu0
  %v520 = vadd.f32 0.0, %v519
  %v521 = vpop.f32.mrf.mxu0
  %v522 = vpop.f32.mrf.mxu0
  %523 = vdwg.mxu0
  %v524 = vadd.f32 %v477, %v518
  %v525 = vadd.f32 %v478, %v520
  %v526 = vtanh.pop %v524
  %v527 = vxor.u32 %v524, 2147483648
  %v528 = vxor.u32 %v525, 2147483648
  %v529 = vmul.f32 %v527, 1.442695
  %v530 = vpow.pop %v529
  %v531 = vmul.f32 %v528, 1.442695
  %v532 = vpow.pop %v531
  %v533 = vadd.f32 %v530, 1.0
  %v534 = vadd.f32 %v532, 1.0
  %v535 = vrcp.pop %v533
  %v536 = vmul.f32 1.0, %v535
  %v537 = vrcp.pop %v534
  %v538 = vmul.f32 1.0, %v537
  %v539 = vmul.f32 %v538, %v470
  %541 = vrot.lane.b32.xlu0 %v526, 64
  %v542 = vpop.permute.xlu0 %541
  %v544 = vmul.f32 %v536, %v542
  %546 = vrot.lane.b32.xlu0 %v544, 64
  %v547 = vpop.permute.xlu0 %546
  %v549 = vadd.f32 %v539, %v547
  %v550 = vtanh.pop %v549
  %552 = vrot.lane.b32.xlu0 %v550, 64
  %v553 = vpop.permute.xlu0 %552
  %v555 = vmul.f32 %v538, %v553
  %v556 = vsel %vm241, 2, 7
  %vm557 = vcmp.lt.s32.totalorder %v556, %v238
  %559 = vrot.lane.b32.xlu0 %v555, 64
  %v560 = vpop.permute.xlu0 %559
  %v562 = vsel %vm557, %v560, %v469
  %v563 = vsel %vm557, %v549, %v470
  %s564 = scalar_lea.vmem [#allocation2], 48
  %v565 = vld [vmem:[%s564] sm:$0xff]
  %v566 = vld [vmem:[%s564 + $0x8] sm:$0xff]
  %s567 = scalar_lea.vmem [#allocation2], 96
  %v568 = vld [vmem:[%s567] sm:$0xff]
  %v569 = vld [vmem:[%s567 + $0x8] sm:$0xff]
  %v570 = vsel %vm246, %v565, %v568
  %v571 = vsel %vm246, %v566, %v569
  %v572 = vpack.c.bf16 %v562, %v562
  %v574 = vsel %vm244, %v572, 0
  %576 = vmatprep.subr.bf16.mxu0 0
  %577 = vmatpush1.bf16.msra.mxu0 0
  %578 = vmatprep.subr.bf16.mxu0 0
  %579 = vmatpush1.bf16.msra.mxu0 0
  %580 = vmatprep.subr.bf16.mxu0 0
  %581 = vmatpush1.bf16.msra.mxu0 0
  %582 = vmatprep.subr.bf16.mxu0 0
  %583 = vmatpush1.bf16.msra.mxu0 0
  %584 = vmatprep.subr.bf16.mxu0 %v285
  %585 = vmatpush1.bf16.msra.mxu0 %v284
  %586 = vmatprep.subr.bf16.mxu0 %v283
  %587 = vmatpush1.bf16.msra.mxu0 %v282
  %588 = vmatprep.subr.bf16.mxu0 %v281
  %589 = vmatpush1.bf16.msra.mxu0 %v280
  %590 = vmatprep.subr.bf16.mxu0 %v279
  %591 = vmatpush1.bf16.msra.mxu0 %v278
  %592 = vmatprep.subr.bf16.mxu0 0
  %593 = vmatpush2.bf16.msra.mxu0 0
  %594 = vmatprep.subr.bf16.mxu0 0
  %595 = vmatpush2.bf16.msra.mxu0 0
  %596 = vmatprep.subr.bf16.mxu0 0
  %597 = vmatpush2.bf16.msra.mxu0 0
  %598 = vmatprep.subr.bf16.mxu0 0
  %599 = vmatpush2.bf16.msra.mxu0 0
  %600 = vmatprep.subr.bf16.mxu0 0
  %601 = vmatpush2.bf16.msra.mxu0 0
  %602 = vmatprep.subr.bf16.mxu0 0
  %603 = vmatpush2.bf16.msra.mxu0 0
  %604 = vmatprep.subr.bf16.mxu0 0
  %605 = vmatpush2.bf16.msra.mxu0 0
  %606 = vmatprep.subr.bf16.mxu0 0
  %607 = vmatpush2.bf16.msra.mxu0 0
  %608 = vmatprep.mubr.bf16.mxu0 0
  %609 = vmatmul.mubr.bf16.gmra.mxu0 %v574
  %v610 = vpop.f32.mrf.mxu0
  %v611 = vadd.f32 0.0, %v610
  %v612 = vpop.f32.mrf.mxu0
  %v613 = vadd.f32 0.0, %v612
  %v614 = vpop.f32.mrf.mxu0
  %v615 = vpop.f32.mrf.mxu0
  %616 = vdwg.mxu0
  %v617 = vadd.f32 %v570, %v611
  %v618 = vadd.f32 %v571, %v613
  %v619 = vtanh.pop %v617
  %v620 = vxor.u32 %v617, 2147483648
  %v621 = vxor.u32 %v618, 2147483648
  %v622 = vmul.f32 %v620, 1.442695
  %v623 = vpow.pop %v622
  %v624 = vmul.f32 %v621, 1.442695
  %v625 = vpow.pop %v624
  %v626 = vadd.f32 %v623, 1.0
  %v627 = vadd.f32 %v625, 1.0
  %v628 = vrcp.pop %v626
  %v629 = vmul.f32 1.0, %v628
  %v630 = vrcp.pop %v627
  %v631 = vmul.f32 1.0, %v630
  %v632 = vmul.f32 %v631, %v563
  %634 = vrot.lane.b32.xlu0 %v619, 64
  %v635 = vpop.permute.xlu0 %634
  %v637 = vmul.f32 %v629, %v635
  %639 = vrot.lane.b32.xlu0 %v637, 64
  %v640 = vpop.permute.xlu0 %639
  %v642 = vadd.f32 %v632, %v640
  %v643 = vtanh.pop %v642
  %645 = vrot.lane.b32.xlu0 %v643, 64
  %v646 = vpop.permute.xlu0 %645
  %v648 = vmul.f32 %v631, %v646
  %v649 = vsel %vm241, 3, 6
  %vm650 = vcmp.lt.s32.totalorder %v649, %v238
  %652 = vrot.lane.b32.xlu0 %v648, 64
  %v653 = vpop.permute.xlu0 %652
  %v655 = vsel %vm650, %v653, %v562
  %v656 = vsel %vm650, %v642, %v563
  %s657 = scalar_lea.vmem [#allocation2], 64
  %v658 = vld [vmem:[%s657] sm:$0xff]
  %v659 = vld [vmem:[%s657 + $0x8] sm:$0xff]
  %s660 = scalar_lea.vmem [#allocation2], 80
  %v661 = vld [vmem:[%s660] sm:$0xff]
  %v662 = vld [vmem:[%s660 + $0x8] sm:$0xff]
  %v663 = vsel %vm246, %v658, %v661
  %v664 = vsel %vm246, %v659, %v662
  %v665 = vpack.c.bf16 %v655, %v655
  %v667 = vsel %vm244, %v665, 0
  %669 = vmatprep.subr.bf16.mxu0 0
  %670 = vmatpush1.bf16.msra.mxu0 0
  %671 = vmatprep.subr.bf16.mxu0 0
  %672 = vmatpush1.bf16.msra.mxu0 0
  %673 = vmatprep.subr.bf16.mxu0 0
  %674 = vmatpush1.bf16.msra.mxu0 0
  %675 = vmatprep.subr.bf16.mxu0 0
  %676 = vmatpush1.bf16.msra.mxu0 0
  %677 = vmatprep.subr.bf16.mxu0 %v285
  %678 = vmatpush1.bf16.msra.mxu0 %v284
  %679 = vmatprep.subr.bf16.mxu0 %v283
  %680 = vmatpush1.bf16.msra.mxu0 %v282
  %681 = vmatprep.subr.bf16.mxu0 %v281
  %682 = vmatpush1.bf16.msra.mxu0 %v280
  %683 = vmatprep.subr.bf16.mxu0 %v279
  %684 = vmatpush1.bf16.msra.mxu0 %v278
  %685 = vmatprep.subr.bf16.mxu0 0
  %686 = vmatpush2.bf16.msra.mxu0 0
  %687 = vmatprep.subr.bf16.mxu0 0
  %688 = vmatpush2.bf16.msra.mxu0 0
  %689 = vmatprep.subr.bf16.mxu0 0
  %690 = vmatpush2.bf16.msra.mxu0 0
  %691 = vmatprep.subr.bf16.mxu0 0
  %692 = vmatpush2.bf16.msra.mxu0 0
  %693 = vmatprep.subr.bf16.mxu0 0
  %694 = vmatpush2.bf16.msra.mxu0 0
  %695 = vmatprep.subr.bf16.mxu0 0
  %696 = vmatpush2.bf16.msra.mxu0 0
  %697 = vmatprep.subr.bf16.mxu0 0
  %698 = vmatpush2.bf16.msra.mxu0 0
  %699 = vmatprep.subr.bf16.mxu0 0
  %700 = vmatpush2.bf16.msra.mxu0 0
  %701 = vmatprep.mubr.bf16.mxu0 0
  %702 = vmatmul.mubr.bf16.gmra.mxu0 %v667
  %v703 = vpop.f32.mrf.mxu0
  %v704 = vadd.f32 0.0, %v703
  %v705 = vpop.f32.mrf.mxu0
  %v706 = vadd.f32 0.0, %v705
  %v707 = vpop.f32.mrf.mxu0
  %v708 = vpop.f32.mrf.mxu0
  %709 = vdwg.mxu0
  %v710 = vadd.f32 %v663, %v704
  %v711 = vadd.f32 %v664, %v706
  %v712 = vtanh.pop %v710
  %v713 = vxor.u32 %v710, 2147483648
  %v714 = vxor.u32 %v711, 2147483648
  %v715 = vmul.f32 %v713, 1.442695
  %v716 = vpow.pop %v715
  %v717 = vmul.f32 %v714, 1.442695
  %v718 = vpow.pop %v717
  %v719 = vadd.f32 %v716, 1.0
  %v720 = vadd.f32 %v718, 1.0
  %v721 = vrcp.pop %v719
  %v722 = vmul.f32 1.0, %v721
  %v723 = vrcp.pop %v720
  %v724 = vmul.f32 1.0, %v723
  %v725 = vmul.f32 %v724, %v656
  %727 = vrot.lane.b32.xlu0 %v712, 64
  %v728 = vpop.permute.xlu0 %727
  %v730 = vmul.f32 %v722, %v728
  %732 = vrot.lane.b32.xlu0 %v730, 64
  %v733 = vpop.permute.xlu0 %732
  %v735 = vadd.f32 %v725, %v733
  %v736 = vtanh.pop %v735
  %738 = vrot.lane.b32.xlu0 %v736, 64
  %v739 = vpop.permute.xlu0 %738
  %v741 = vmul.f32 %v724, %v739
  %v742 = vsel %vm241, 4, 5
  %vm743 = vcmp.lt.s32.totalorder %v742, %v238
  %745 = vrot.lane.b32.xlu0 %v741, 64
  %v746 = vpop.permute.xlu0 %745
  %v748 = vsel %vm743, %v746, %v655
  %v749 = vsel %vm743, %v735, %v656
  %v750 = vsel %vm246, %v661, %v658
  %v751 = vsel %vm246, %v662, %v659
  %v752 = vpack.c.bf16 %v748, %v748
  %v754 = vsel %vm244, %v752, 0
  %756 = vmatprep.subr.bf16.mxu0 0
  %757 = vmatpush1.bf16.msra.mxu0 0
  %758 = vmatprep.subr.bf16.mxu0 0
  %759 = vmatpush1.bf16.msra.mxu0 0
  %760 = vmatprep.subr.bf16.mxu0 0
  %761 = vmatpush1.bf16.msra.mxu0 0
  %762 = vmatprep.subr.bf16.mxu0 0
  %763 = vmatpush1.bf16.msra.mxu0 0
  %764 = vmatprep.subr.bf16.mxu0 %v285
  %765 = vmatpush1.bf16.msra.mxu0 %v284
  %766 = vmatprep.subr.bf16.mxu0 %v283
  %767 = vmatpush1.bf16.msra.mxu0 %v282
  %768 = vmatprep.subr.bf16.mxu0 %v281
  %769 = vmatpush1.bf16.msra.mxu0 %v280
  %770 = vmatprep.subr.bf16.mxu0 %v279
  %771 = vmatpush1.bf16.msra.mxu0 %v278
  %772 = vmatprep.subr.bf16.mxu0 0
  %773 = vmatpush2.bf16.msra.mxu0 0
  %774 = vmatprep.subr.bf16.mxu0 0
  %775 = vmatpush2.bf16.msra.mxu0 0
  %776 = vmatprep.subr.bf16.mxu0 0
  %777 = vmatpush2.bf16.msra.mxu0 0
  %778 = vmatprep.subr.bf16.mxu0 0
  %779 = vmatpush2.bf16.msra.mxu0 0
  %780 = vmatprep.subr.bf16.mxu0 0
  %781 = vmatpush2.bf16.msra.mxu0 0
  %782 = vmatprep.subr.bf16.mxu0 0
  %783 = vmatpush2.bf16.msra.mxu0 0
  %784 = vmatprep.subr.bf16.mxu0 0
  %785 = vmatpush2.bf16.msra.mxu0 0
  %786 = vmatprep.subr.bf16.mxu0 0
  %787 = vmatpush2.bf16.msra.mxu0 0
  %788 = vmatprep.mubr.bf16.mxu0 0
  %789 = vmatmul.mubr.bf16.gmra.mxu0 %v754
  %v790 = vpop.f32.mrf.mxu0
  %v791 = vadd.f32 0.0, %v790
  %v792 = vpop.f32.mrf.mxu0
  %v793 = vadd.f32 0.0, %v792
  %v794 = vpop.f32.mrf.mxu0
  %v795 = vpop.f32.mrf.mxu0
  %796 = vdwg.mxu0
  %v797 = vadd.f32 %v750, %v791
  %v798 = vadd.f32 %v751, %v793
  %v799 = vtanh.pop %v797
  %v800 = vxor.u32 %v797, 2147483648
  %v801 = vxor.u32 %v798, 2147483648
  %v802 = vmul.f32 %v800, 1.442695
  %v803 = vpow.pop %v802
  %v804 = vmul.f32 %v801, 1.442695
  %v805 = vpow.pop %v804
  %v806 = vadd.f32 %v803, 1.0
  %v807 = vadd.f32 %v805, 1.0
  %v808 = vrcp.pop %v806
  %v809 = vmul.f32 1.0, %v808
  %v810 = vrcp.pop %v807
  %v811 = vmul.f32 1.0, %v810
  %v812 = vmul.f32 %v811, %v749
  %814 = vrot.lane.b32.xlu0 %v799, 64
  %v815 = vpop.permute.xlu0 %814
  %v817 = vmul.f32 %v809, %v815
  %819 = vrot.lane.b32.xlu0 %v817, 64
  %v820 = vpop.permute.xlu0 %819
  %v822 = vadd.f32 %v812, %v820
  %v823 = vtanh.pop %v822
  %825 = vrot.lane.b32.xlu0 %v823, 64
  %v826 = vpop.permute.xlu0 %825
  %v828 = vmul.f32 %v811, %v826
  %v829 = vsel %vm241, 5, 4
  %vm830 = vcmp.lt.s32.totalorder %v829, %v238
  %832 = vrot.lane.b32.xlu0 %v828, 64
  %v833 = vpop.permute.xlu0 %832
  %v835 = vsel %vm830, %v833, %v748
  %v836 = vsel %vm830, %v822, %v749
  %v837 = vsel %vm246, %v568, %v565
  %v838 = vsel %vm246, %v569, %v566
  %v839 = vpack.c.bf16 %v835, %v835
  %v841 = vsel %vm244, %v839, 0
  %843 = vmatprep.subr.bf16.mxu0 0
  %844 = vmatpush1.bf16.msra.mxu0 0
  %845 = vmatprep.subr.bf16.mxu0 0
  %846 = vmatpush1.bf16.msra.mxu0 0
  %847 = vmatprep.subr.bf16.mxu0 0
  %848 = vmatpush1.bf16.msra.mxu0 0
  %849 = vmatprep.subr.bf16.mxu0 0
  %850 = vmatpush1.bf16.msra.mxu0 0
  %851 = vmatprep.subr.bf16.mxu0 %v285
  %852 = vmatpush1.bf16.msra.mxu0 %v284
  %853 = vmatprep.subr.bf16.mxu0 %v283
  %854 = vmatpush1.bf16.msra.mxu0 %v282
  %855 = vmatprep.subr.bf16.mxu0 %v281
  %856 = vmatpush1.bf16.msra.mxu0 %v280
  %857 = vmatprep.subr.bf16.mxu0 %v279
  %858 = vmatpush1.bf16.msra.mxu0 %v278
  %859 = vmatprep.subr.bf16.mxu0 0
  %860 = vmatpush2.bf16.msra.mxu0 0
  %861 = vmatprep.subr.bf16.mxu0 0
  %862 = vmatpush2.bf16.msra.mxu0 0
  %863 = vmatprep.subr.bf16.mxu0 0
  %864 = vmatpush2.bf16.msra.mxu0 0
  %865 = vmatprep.subr.bf16.mxu0 0
  %866 = vmatpush2.bf16.msra.mxu0 0
  %867 = vmatprep.subr.bf16.mxu0 0
  %868 = vmatpush2.bf16.msra.mxu0 0
  %869 = vmatprep.subr.bf16.mxu0 0
  %870 = vmatpush2.bf16.msra.mxu0 0
  %871 = vmatprep.subr.bf16.mxu0 0
  %872 = vmatpush2.bf16.msra.mxu0 0
  %873 = vmatprep.subr.bf16.mxu0 0
  %874 = vmatpush2.bf16.msra.mxu0 0
  %875 = vmatprep.mubr.bf16.mxu0 0
  %876 = vmatmul.mubr.bf16.gmra.mxu0 %v841
  %v877 = vpop.f32.mrf.mxu0
  %v878 = vadd.f32 0.0, %v877
  %v879 = vpop.f32.mrf.mxu0
  %v880 = vadd.f32 0.0, %v879
  %v881 = vpop.f32.mrf.mxu0
  %v882 = vpop.f32.mrf.mxu0
  %883 = vdwg.mxu0
  %v884 = vadd.f32 %v837, %v878
  %v885 = vadd.f32 %v838, %v880
  %v886 = vtanh.pop %v884
  %v887 = vxor.u32 %v884, 2147483648
  %v888 = vxor.u32 %v885, 2147483648
  %v889 = vmul.f32 %v887, 1.442695
  %v890 = vpow.pop %v889
  %v891 = vmul.f32 %v888, 1.442695
  %v892 = vpow.pop %v891
  %v893 = vadd.f32 %v890, 1.0
  %v894 = vadd.f32 %v892, 1.0
  %v895 = vrcp.pop %v893
  %v896 = vmul.f32 1.0, %v895
  %v897 = vrcp.pop %v894
  %v898 = vmul.f32 1.0, %v897
  %v899 = vmul.f32 %v898, %v836
  %901 = vrot.lane.b32.xlu0 %v886, 64
  %v902 = vpop.permute.xlu0 %901
  %v904 = vmul.f32 %v896, %v902
  %906 = vrot.lane.b32.xlu0 %v904, 64
  %v907 = vpop.permute.xlu0 %906
  %v909 = vadd.f32 %v899, %v907
  %v910 = vtanh.pop %v909
  %912 = vrot.lane.b32.xlu0 %v910, 64
  %v913 = vpop.permute.xlu0 %912
  %v915 = vmul.f32 %v898, %v913
  %v916 = vsel %vm241, 6, 3
  %vm917 = vcmp.lt.s32.totalorder %v916, %v238
  %919 = vrot.lane.b32.xlu0 %v915, 64
  %v920 = vpop.permute.xlu0 %919
  %v922 = vsel %vm917, %v920, %v835
  %v923 = vsel %vm917, %v909, %v836
  %v924 = vsel %vm246, %v475, %v472
  %v925 = vsel %vm246, %v476, %v473
  %v926 = vpack.c.bf16 %v922, %v922
  %v928 = vsel %vm244, %v926, 0
  %930 = vmatprep.subr.bf16.mxu0 0
  %931 = vmatpush1.bf16.msra.mxu0 0
  %932 = vmatprep.subr.bf16.mxu0 0
  %933 = vmatpush1.bf16.msra.mxu0 0
  %934 = vmatprep.subr.bf16.mxu0 0
  %935 = vmatpush1.bf16.msra.mxu0 0
  %936 = vmatprep.subr.bf16.mxu0 0
  %937 = vmatpush1.bf16.msra.mxu0 0
  %938 = vmatprep.subr.bf16.mxu0 %v285
  %939 = vmatpush1.bf16.msra.mxu0 %v284
  %940 = vmatprep.subr.bf16.mxu0 %v283
  %941 = vmatpush1.bf16.msra.mxu0 %v282
  %942 = vmatprep.subr.bf16.mxu0 %v281
  %943 = vmatpush1.bf16.msra.mxu0 %v280
  %944 = vmatprep.subr.bf16.mxu0 %v279
  %945 = vmatpush1.bf16.msra.mxu0 %v278
  %946 = vmatprep.subr.bf16.mxu0 0
  %947 = vmatpush2.bf16.msra.mxu0 0
  %948 = vmatprep.subr.bf16.mxu0 0
  %949 = vmatpush2.bf16.msra.mxu0 0
  %950 = vmatprep.subr.bf16.mxu0 0
  %951 = vmatpush2.bf16.msra.mxu0 0
  %952 = vmatprep.subr.bf16.mxu0 0
  %953 = vmatpush2.bf16.msra.mxu0 0
  %954 = vmatprep.subr.bf16.mxu0 0
  %955 = vmatpush2.bf16.msra.mxu0 0
  %956 = vmatprep.subr.bf16.mxu0 0
  %957 = vmatpush2.bf16.msra.mxu0 0
  %958 = vmatprep.subr.bf16.mxu0 0
  %959 = vmatpush2.bf16.msra.mxu0 0
  %960 = vmatprep.subr.bf16.mxu0 0
  %961 = vmatpush2.bf16.msra.mxu0 0
  %962 = vmatprep.mubr.bf16.mxu0 0
  %963 = vmatmul.mubr.bf16.gmra.mxu0 %v928
  %v964 = vpop.f32.mrf.mxu0
  %v965 = vadd.f32 0.0, %v964
  %v966 = vpop.f32.mrf.mxu0
  %v967 = vadd.f32 0.0, %v966
  %v968 = vpop.f32.mrf.mxu0
  %v969 = vpop.f32.mrf.mxu0
  %970 = vdwg.mxu0
  %v971 = vadd.f32 %v924, %v965
  %v972 = vadd.f32 %v925, %v967
  %v973 = vtanh.pop %v971
  %v974 = vxor.u32 %v971, 2147483648
  %v975 = vxor.u32 %v972, 2147483648
  %v976 = vmul.f32 %v974, 1.442695
  %v977 = vpow.pop %v976
  %v978 = vmul.f32 %v975, 1.442695
  %v979 = vpow.pop %v978
  %v980 = vadd.f32 %v977, 1.0
  %v981 = vadd.f32 %v979, 1.0
  %v982 = vrcp.pop %v980
  %v983 = vmul.f32 1.0, %v982
  %v984 = vrcp.pop %v981
  %v985 = vmul.f32 1.0, %v984
  %v986 = vmul.f32 %v985, %v923
  %988 = vrot.lane.b32.xlu0 %v973, 64
  %v989 = vpop.permute.xlu0 %988
  %v991 = vmul.f32 %v983, %v989
  %993 = vrot.lane.b32.xlu0 %v991, 64
  %v994 = vpop.permute.xlu0 %993
  %v996 = vadd.f32 %v986, %v994
  %v997 = vtanh.pop %v996
  %999 = vrot.lane.b32.xlu0 %v997, 64
  %v1000 = vpop.permute.xlu0 %999
  %v1002 = vmul.f32 %v985, %v1000
  %v1003 = vsel %vm241, 7, 2
  %vm1004 = vcmp.lt.s32.totalorder %v1003, %v238
  %1006 = vrot.lane.b32.xlu0 %v1002, 64
  %v1007 = vpop.permute.xlu0 %1006
  %v1009 = vsel %vm1004, %v1007, %v922
  %v1010 = vsel %vm1004, %v996, %v923
  %v1011 = vsel %vm246, %v382, %v379
  %v1012 = vsel %vm246, %v383, %v380
  %v1013 = vpack.c.bf16 %v1009, %v1009
  %v1015 = vsel %vm244, %v1013, 0
  %1017 = vmatprep.subr.bf16.mxu0 0
  %1018 = vmatpush1.bf16.msra.mxu0 0
  %1019 = vmatprep.subr.bf16.mxu0 0
  %1020 = vmatpush1.bf16.msra.mxu0 0
  %1021 = vmatprep.subr.bf16.mxu0 0
  %1022 = vmatpush1.bf16.msra.mxu0 0
  %1023 = vmatprep.subr.bf16.mxu0 0
  %1024 = vmatpush1.bf16.msra.mxu0 0
  %1025 = vmatprep.subr.bf16.mxu0 %v285
  %1026 = vmatpush1.bf16.msra.mxu0 %v284
  %1027 = vmatprep.subr.bf16.mxu0 %v283
  %1028 = vmatpush1.bf16.msra.mxu0 %v282
  %1029 = vmatprep.subr.bf16.mxu0 %v281
  %1030 = vmatpush1.bf16.msra.mxu0 %v280
  %1031 = vmatprep.subr.bf16.mxu0 %v279
  %1032 = vmatpush1.bf16.msra.mxu0 %v278
  %1033 = vmatprep.subr.bf16.mxu0 0
  %1034 = vmatpush2.bf16.msra.mxu0 0
  %1035 = vmatprep.subr.bf16.mxu0 0
  %1036 = vmatpush2.bf16.msra.mxu0 0
  %1037 = vmatprep.subr.bf16.mxu0 0
  %1038 = vmatpush2.bf16.msra.mxu0 0
  %1039 = vmatprep.subr.bf16.mxu0 0
  %1040 = vmatpush2.bf16.msra.mxu0 0
  %1041 = vmatprep.subr.bf16.mxu0 0
  %1042 = vmatpush2.bf16.msra.mxu0 0
  %1043 = vmatprep.subr.bf16.mxu0 0
  %1044 = vmatpush2.bf16.msra.mxu0 0
  %1045 = vmatprep.subr.bf16.mxu0 0
  %1046 = vmatpush2.bf16.msra.mxu0 0
  %1047 = vmatprep.subr.bf16.mxu0 0
  %1048 = vmatpush2.bf16.msra.mxu0 0
  %1049 = vmatprep.mubr.bf16.mxu0 0
  %1050 = vmatmul.mubr.bf16.gmra.mxu0 %v1015
  %v1051 = vpop.f32.mrf.mxu0
  %v1052 = vadd.f32 0.0, %v1051
  %v1053 = vpop.f32.mrf.mxu0
  %v1054 = vadd.f32 0.0, %v1053
  %v1055 = vpop.f32.mrf.mxu0
  %v1056 = vpop.f32.mrf.mxu0
  %1057 = vdwg.mxu0
  %v1058 = vadd.f32 %v1011, %v1052
  %v1059 = vadd.f32 %v1012, %v1054
  %v1060 = vtanh.pop %v1058
  %v1061 = vxor.u32 %v1058, 2147483648
  %v1062 = vxor.u32 %v1059, 2147483648
  %v1063 = vmul.f32 %v1061, 1.442695
  %v1064 = vpow.pop %v1063
  %v1065 = vmul.f32 %v1062, 1.442695
  %v1066 = vpow.pop %v1065
  %v1067 = vadd.f32 %v1064, 1.0
  %v1068 = vadd.f32 %v1066, 1.0
  %v1069 = vrcp.pop %v1067
  %v1070 = vmul.f32 1.0, %v1069
  %v1071 = vrcp.pop %v1068
  %v1072 = vmul.f32 1.0, %v1071
  %v1073 = vmul.f32 %v1072, %v1010
  %1075 = vrot.lane.b32.xlu0 %v1060, 64
  %v1076 = vpop.permute.xlu0 %1075
  %v1078 = vmul.f32 %v1070, %v1076
  %1080 = vrot.lane.b32.xlu0 %v1078, 64
  %v1081 = vpop.permute.xlu0 %1080
  %v1083 = vadd.f32 %v1073, %v1081
  %v1084 = vtanh.pop %v1083
  %1086 = vrot.lane.b32.xlu0 %v1084, 64
  %v1087 = vpop.permute.xlu0 %1086
  %v1089 = vmul.f32 %v1072, %v1087
  %v1090 = vsel %vm241, 8, 1
  %vm1091 = vcmp.lt.s32.totalorder %v1090, %v238
  %1093 = vrot.lane.b32.xlu0 %v1089, 64
  %v1094 = vpop.permute.xlu0 %1093
  %v1096 = vsel %vm1091, %v1094, %v1009
  %v1097 = vsel %vm1091, %v1083, %v1010
  %v1098 = vsel %vm246, %v250, %v247
  %v1099 = vsel %vm246, %v251, %v248
  %v1100 = vpack.c.bf16 %v1096, %v1096
  %v1102 = vsel %vm244, %v1100, 0
  %1104 = vmatprep.subr.bf16.mxu0 0
  %1105 = vmatpush1.bf16.msra.mxu0 0
  %1106 = vmatprep.subr.bf16.mxu0 0
  %1107 = vmatpush1.bf16.msra.mxu0 0
  %1108 = vmatprep.subr.bf16.mxu0 0
  %1109 = vmatpush1.bf16.msra.mxu0 0
  %1110 = vmatprep.subr.bf16.mxu0 0
  %1111 = vmatpush1.bf16.msra.mxu0 0
  %1112 = vmatprep.subr.bf16.mxu0 %v285
  %1113 = vmatpush1.bf16.msra.mxu0 %v284
  %1114 = vmatprep.subr.bf16.mxu0 %v283
  %1115 = vmatpush1.bf16.msra.mxu0 %v282
  %1116 = vmatprep.subr.bf16.mxu0 %v281
  %1117 = vmatpush1.bf16.msra.mxu0 %v280
  %1118 = vmatprep.subr.bf16.mxu0 %v279
  %1119 = vmatpush1.bf16.msra.mxu0 %v278
  %1120 = vmatprep.subr.bf16.mxu0 0
  %1121 = vmatpush2.bf16.msra.mxu0 0
  %1122 = vmatprep.subr.bf16.mxu0 0
  %1123 = vmatpush2.bf16.msra.mxu0 0
  %1124 = vmatprep.subr.bf16.mxu0 0
  %1125 = vmatpush2.bf16.msra.mxu0 0
  %1126 = vmatprep.subr.bf16.mxu0 0
  %1127 = vmatpush2.bf16.msra.mxu0 0
  %1128 = vmatprep.subr.bf16.mxu0 0
  %1129 = vmatpush2.bf16.msra.mxu0 0
  %1130 = vmatprep.subr.bf16.mxu0 0
  %1131 = vmatpush2.bf16.msra.mxu0 0
  %1132 = vmatprep.subr.bf16.mxu0 0
  %1133 = vmatpush2.bf16.msra.mxu0 0
  %1134 = vmatprep.subr.bf16.mxu0 0
  %1135 = vmatpush2.bf16.msra.mxu0 0
  %1136 = vmatprep.mubr.bf16.mxu0 0
  %1137 = vmatmul.mubr.bf16.gmra.mxu0 %v1102
  %v1138 = vpop.f32.mrf.mxu0
  %v1139 = vadd.f32 0.0, %v1138
  %v1140 = vpop.f32.mrf.mxu0
  %v1141 = vadd.f32 0.0, %v1140
  %v1142 = vpop.f32.mrf.mxu0
  %v1143 = vpop.f32.mrf.mxu0
  %1144 = vdwg.mxu0
  %v1145 = vadd.f32 %v1098, %v1139
  %v1146 = vadd.f32 %v1099, %v1141
  %v1147 = vtanh.pop %v1145
  %v1148 = vxor.u32 %v1145, 2147483648
  %v1149 = vxor.u32 %v1146, 2147483648
  %v1150 = vmul.f32 %v1148, 1.442695
  %v1151 = vpow.pop %v1150
  %v1152 = vmul.f32 %v1149, 1.442695
  %v1153 = vpow.pop %v1152
  %v1154 = vadd.f32 %v1151, 1.0
  %v1155 = vadd.f32 %v1153, 1.0
  %v1156 = vrcp.pop %v1154
  %v1157 = vmul.f32 1.0, %v1156
  %v1158 = vrcp.pop %v1155
  %v1159 = vmul.f32 1.0, %v1158
  %v1160 = vmul.f32 %v1159, %v1097
  %1162 = vrot.lane.b32.xlu0 %v1147, 64
  %v1163 = vpop.permute.xlu0 %1162
  %v1165 = vmul.f32 %v1157, %v1163
  %1167 = vrot.lane.b32.xlu0 %v1165, 64
  %v1168 = vpop.permute.xlu0 %1167
  %v1170 = vadd.f32 %v1160, %v1168
  %v1171 = vtanh.pop %v1170
  %1173 = vrot.lane.b32.xlu0 %v1171, 64
  %v1174 = vpop.permute.xlu0 %1173
  %v1176 = vmul.f32 %v1159, %v1174
  %v1177 = vsel %vm241, 9, 0
  %vm1178 = vcmp.lt.s32.totalorder %v1177, %v238
  %1180 = vrot.lane.b32.xlu0 %v1176, 64
  %v1181 = vpop.permute.xlu0 %1180
  %v1183 = vsel %vm1178, %v1181, %v1096
  %1184 = vst.msk [vmem:[%s5] sm:$0xff] %vm244, %v1183
  // Predicated region
  $region22: #{vanilla_bilstm_forward.1} parent=0 // pred_check
    _
  $region23: #{vanilla_bilstm_forward.1} parent=0 // pred_check_branch
    %1186 = sbr.rel (0) target = $region25
  $region24: #{vanilla_bilstm_forward.1} parent=0 // pred_region
    _
  $region25: #{vanilla_bilstm_forward.1} parent=0 // pred_fallthru
    _
  // Predicated region
  $region26: #{vanilla_bilstm_forward.1} parent=0 // pred_check
    _
  $region27: #{vanilla_bilstm_forward.1} parent=0 // pred_check_branch
    %1188 = sbr.rel (0) target = $region29
  $region28: #{vanilla_bilstm_forward.1} parent=0 // pred_region
    _
  $region29: #{vanilla_bilstm_forward.1} parent=0 // pred_fallthru
    _

</llo_original>
